<compile_context>
chip_gen: v5e
topology: v5e:2x2
jax: 0.10.0
libtpu: 0.0.40
codegen_flags: <defaults>
</compile_context>

<pallas_src>
import functools

import jax
import jax.numpy as jnp
from jax import lax
from jax.experimental import pallas as pl
from jax.experimental.pallas import tpu as pltpu


# ----------------------------- helpers --------------------------------------

def _round_up(x, m):
    return ((x + m - 1) // m) * m


def _pad2d(a, rows, cols):
    r, c = a.shape
    if r == rows and c == cols:
        return a
    return jnp.pad(a, ((0, rows - r), (0, cols - c)))


def _validity(shape, row_off, col_off, rows_total, cols_total, need_rows, need_cols):
    """Boolean validity mask for a padded tile (None => tile fully valid)."""
    ok = None
    if need_rows:
        ok = (lax.broadcasted_iota(jnp.int32, shape, 0) + row_off) < rows_total
    if need_cols:
        col_ok = (lax.broadcasted_iota(jnp.int32, shape, 1) + col_off) < cols_total
        ok = col_ok if ok is None else (ok & col_ok)
    return ok


def _cont_sparse_mask(s_f32, temp, training):
    """ContSparseLayer mask: sigmoid(temp * s) while training, hard (s > 0) in eval."""
    # TODO(synk): ablation modes (zero/random/randomly_sampled/complement_sampled)
    #             and the hard_concrete / magnitude_pruning mask methods are not implemented.
    if training:
        return jax.nn.sigmoid(temp * s_f32)
    return (s_f32 > 0.0).astype(jnp.float32)


def _store_output_tile(y_f32, y_ref, sq_ref, row_off, col_off, B, Dout,
                       pad_rows, pad_cols):
    """Write the output tile and its sum(y^2) partial (padding excluded from the sum)."""
    y_ref[...] = y_f32.astype(y_ref.dtype)
    ok = _validity(y_f32.shape, row_off, col_off, B, Dout, pad_rows, pad_cols)
    if ok is not None:
        y_f32 = jnp.where(ok, y_f32, 0.0)
    sq_ref[...] = jnp.full((1, 1, 1, 1), jnp.sum(y_f32 * y_f32), jnp.float32)


# ----------------------------- kernels --------------------------------------

def _mask_prepass_kernel(temp_ref, w_ref, s_ref, wm_ref, l0_ref, *,
                         training, Dout, Din, tn, tk, pad_n, pad_k):
    """Prepass: wm = (w * mask) in compute dtype + exact per-tile L0 (reads w, s once)."""
    j = pl.program_id(0)
    k = pl.program_id(1)
    mask = _cont_sparse_mask(s_ref[...].astype(jnp.float32), temp_ref[0], training)
    ok = _validity((tn, tk), j * tn, k * tk, Dout, Din, pad_n, pad_k)
    if ok is not None:
        mask = jnp.where(ok, mask, 0.0)   # exact L0; zero masked weight in padded region
    wm_ref[...] = (w_ref[...].astype(jnp.float32) * mask).astype(wm_ref.dtype)
    l0_ref[...] = jnp.full((1, 1, 1, 1), jnp.sum(mask), jnp.float32)


def _stream_matmul_kernel(x_ref, wm_ref, b_ref, y_ref, sq_ref, *scratch, nk,
                          B, Dout, tm, tn, pad_m, pad_n):
    """Hot loop: y[i,j] += x[i,k] . wm[j,k]^T ; bias + sum(y^2) fused at finalize."""
    i = pl.program_id(0)
    j = pl.program_id(1)
    k = pl.program_id(2)
    # Contract the last dims of both operands -> no transpose on the hot path.
    part = lax.dot_general(x_ref[...], wm_ref[...],
                           dimension_numbers=(((1,), (1,)), ((), ())),
                           preferred_element_type=jnp.float32)
    if nk == 1:
        y = part + b_ref[...].astype(jnp.float32)
        _store_output_tile(y, y_ref, sq_ref, i * tm, j * tn, B, Dout, pad_m, pad_n)
    else:
        acc_ref = scratch[0]

        @pl.when(k == 0)
        def _assign():               # assign (not zero-init + add): saves one store pass
            acc_ref[...] = part

        @pl.when(k > 0)
        def _accumulate():
            acc_ref[...] += part

        @pl.when(k == nk - 1)
        def _finalize():
            y = acc_ref[...] + b_ref[...].astype(jnp.float32)
            _store_output_tile(y, y_ref, sq_ref, i * tm, j * tn, B, Dout, pad_m, pad_n)


def _fused_masked_matmul_kernel(temp_ref, x_ref, w_ref, s_ref, b_ref,
                                y_ref, l0_ref, sq_ref, *scratch, nk, training,
                                B, Dout, Din, tm, tn, tk, compute_dtype,
                                pad_m, pad_n, pad_k):
    """Single-batch-tile path (n_i == 1): mask + matmul + L0 + sum(y^2) in one kernel.

    Each weight tile is read exactly once here, so the prepass round-trip is skipped.
    """
    j = pl.program_id(0)
    k = pl.program_id(1)
    mask = _cont_sparse_mask(s_ref[...].astype(jnp.float32), temp_ref[0], training)
    ok = _validity((tn, tk), j * tn, k * tk, Dout, Din, pad_n, pad_k)
    if ok is not None:
        mask = jnp.where(ok, mask, 0.0)
    w_masked = (w_ref[...].astype(jnp.float32) * mask).astype(compute_dtype)
    l0_ref[...] = jnp.full((1, 1, 1, 1), jnp.sum(mask), jnp.float32)

    part = lax.dot_general(x_ref[...], w_masked,
                           dimension_numbers=(((1,), (1,)), ((), ())),
                           preferred_element_type=jnp.float32)
    if nk == 1:
        y = part + b_ref[...].astype(jnp.float32)
        _store_output_tile(y, y_ref, sq_ref, 0, j * tn, B, Dout, pad_m, pad_n)
    else:
        acc_ref = scratch[0]

        @pl.when(k == 0)
        def _assign():
            acc_ref[...] = part

        @pl.when(k > 0)
        def _accumulate():
            acc_ref[...] += part

        @pl.when(k == nk - 1)
        def _finalize():
            y = acc_ref[...] + b_ref[...].astype(jnp.float32)
            _store_output_tile(y, y_ref, sq_ref, 0, j * tn, B, Dout, pad_m, pad_n)


# ----------------------------- wrappers --------------------------------------

def masked_linear(x, weight, mask_weight, bias, temperature, *,
                  training=True, compute_dtype=jnp.bfloat16,
                  tm=None, tn=None, tk=None, out_dtype=None):
    """ContSparseLinear forward. Returns (y[B, Dout], l0, sum(y^2))."""
    B, Din = x.shape
    Dout, Din2 = weight.shape
    assert Din == Din2 and bias.shape == (Dout,)
    out_dtype = out_dtype or x.dtype   # pass jnp.bfloat16 to halve y writeback traffic

    # ---- tile selection (lane-dense: last block dim % 128 == 0, sublane dim % 8 == 0) ----
    if tm is None:
        tm = min(512, _round_up(B, 8))            # big batch tiles amortize weight traffic
    if tk is None:
        tk = _round_up(Din, 128)                  # full reduction in one block when it fits
        if tk > 2048:
            tk = 512
    if tn is None:
        tn = min(256, _round_up(Dout, 128))       # 256 = native v6e/v7x MXU tile
        n_i0 = _round_up(B, tm) // tm
        if n_i0 * (_round_up(Dout, tn) // tn) < 2 and Dout > 128:
            tn = 128                              # v7x megacore: give both TCs work
    assert tm % 8 == 0 and tn % 128 == 0 and tk % 128 == 0

    Bp, Doutp, Dinp = _round_up(B, tm), _round_up(Dout, tn), _round_up(Din, tk)
    n_i, n_j, n_k = Bp // tm, Doutp // tn, Dinp // tk
    pad_m, pad_n, pad_k = (Bp != B), (Doutp != Dout), (Dinp != Din)

    # For a training loop, pad/convert the frozen weight/mask/bias ONCE outside the step
    # (or use tile-multiple dims) — these pads are no-ops when shapes already align.
    xp = _pad2d(x.astype(compute_dtype), Bp, Dinp)   # bf16 x: halves streamed activation bytes
    wp = _pad2d(weight, Doutp, Dinp)
    sp = _pad2d(mask_weight, Doutp, Dinp)            # padding handled in-kernel (validity mask)
    bp = _pad2d(bias.reshape(1, Dout), 1, Doutp)
    temp = jnp.asarray([temperature], dtype=jnp.float32)

    # VMEM budget from the double-buffered footprint, clamped below v7x's 64 MiB.
    cd, ob = jnp.dtype(compute_dtype).itemsize, jnp.dtype(out_dtype).itemsize
    est = (2 * tm * tk * cd + 2 * tn * tk * (8 + cd) + 2 * tm * tn * ob
           + tm * tn * 4 + 2 * tn * 4)
    vmem_limit = int(min(max(2 * est, 32 << 20), 48 << 20))

    acc_scratch = [pltpu.VMEM((tm, tn), jnp.float32)] if n_k > 1 else []

    if n_i == 1:
        kernel = functools.partial(
            _fused_masked_matmul_kernel, nk=n_k, training=training,
            B=B, Dout=Dout, Din=Din, tm=tm, tn=tn, tk=tk,
            compute_dtype=compute_dtype, pad_m=pad_m, pad_n=pad_n, pad_k=pad_k)
        y_pad, l0_part, sq_part = pl.pallas_call(
            kernel,
            out_shape=(jax.ShapeDtypeStruct((Bp, Doutp), out_dtype),
                       jax.ShapeDtypeStruct((n_j, n_k, 1, 1), jnp.float32),
                       jax.ShapeDtypeStruct((n_j, 1, 1, 1), jnp.float32)),
            grid=(n_j, n_k),
            in_specs=[
                pl.BlockSpec(memory_space=pltpu.MemorySpace.SMEM),      # temperature
                pl.BlockSpec((tm, tk), lambda j, k: (0, k)),            # x (compute_dtype)
                pl.BlockSpec((tn, tk), lambda j, k: (j, k)),            # weight (f32)
                pl.BlockSpec((tn, tk), lambda j, k: (j, k)),            # mask_weight (f32)
                pl.BlockSpec((1, tn), lambda j, k: (0, j)),             # bias
            ],
            out_specs=(
                pl.BlockSpec((tm, tn), lambda j, k: (0, j)),            # y
                pl.BlockSpec((1, 1, 1, 1), lambda j, k: (j, k, 0, 0)),  # L0 partials
                pl.BlockSpec((1, 1, 1, 1), lambda j, k: (j, 0, 0, 0)),  # sum(y^2) partials
            ),
            scratch_shapes=acc_scratch,
            compiler_params=pltpu.CompilerParams(
                dimension_semantics=("parallel", "arbitrary"),
                vmem_limit_bytes=vmem_limit),
        )(temp, xp, wp, sp, bp)
    else:
        # ---- Prepass: read f32 (w, s) once; emit bf16 masked weight + exact L0 ----
        prep = functools.partial(
            _mask_prepass_kernel, training=training, Dout=Dout, Din=Din,
            tn=tn, tk=tk, pad_n=pad_n, pad_k=pad_k)
        wm, l0_part = pl.pallas_call(
            prep,
            out_shape=(jax.ShapeDtypeStruct((Doutp, Dinp), compute_dtype),
                       jax.ShapeDtypeStruct((n_j, n_k, 1, 1), jnp.float32)),
            grid=(n_j, n_k),
            in_specs=[
                pl.BlockSpec(memory_space=pltpu.MemorySpace.SMEM),
                pl.BlockSpec((tn, tk), lambda j, k: (j, k)),
                pl.BlockSpec((tn, tk), lambda j, k: (j, k)),
            ],
            out_specs=(
                pl.BlockSpec((tn, tk), lambda j, k: (j, k)),
                pl.BlockSpec((1, 1, 1, 1), lambda j, k: (j, k, 0, 0)),
            ),
            compiler_params=pltpu.CompilerParams(
                dimension_semantics=("parallel", "parallel"),
                vmem_limit_bytes=vmem_limit),
        )(temp, wp, sp)

        # ---- Hot loop: stream bf16 x / bf16 masked weight only -> MXU-bound ----
        mm = functools.partial(
            _stream_matmul_kernel, nk=n_k, B=B, Dout=Dout, tm=tm, tn=tn,
            pad_m=pad_m, pad_n=pad_n)
        y_pad, sq_part = pl.pallas_call(
            mm,
            out_shape=(jax.ShapeDtypeStruct((Bp, Doutp), out_dtype),
                       jax.ShapeDtypeStruct((n_i, n_j, 1, 1), jnp.float32)),
            grid=(n_i, n_j, n_k),
            in_specs=[
                pl.BlockSpec((tm, tk), lambda i, j, k: (i, k)),         # x
                pl.BlockSpec((tn, tk), lambda i, j, k: (j, k)),         # masked weight
                pl.BlockSpec((1, tn), lambda i, j, k: (0, j)),          # bias
            ],
            out_specs=(
                pl.BlockSpec((tm, tn), lambda i, j, k: (i, j)),
                pl.BlockSpec((1, 1, 1, 1), lambda i, j, k: (i, j, 0, 0)),
            ),
            scratch_shapes=acc_scratch,
            compiler_params=pltpu.CompilerParams(
                dimension_semantics=("parallel", "parallel", "arbitrary"),
                vmem_limit_bytes=vmem_limit),
        )(xp, wm, bp)

    return y_pad[:B, :Dout], jnp.sum(l0_part), jnp.sum(sq_part)


def circuit_model_forward(x, params, *, temperature=1.0, add_l0=True,
                          l0_lambda=1e-3, training=True,
                          compute_dtype=jnp.bfloat16, tm=None, tn=None, tk=None,
                          out_dtype=None):
    """CircuitModel.forward for a single ContSparseLinear target layer.

    The wrapped model's own (synthetic) loss is 0.5 * mean(y^2); its sum(y^2) is
    fused into the kernel finalize so the logits are not re-read from HBM.
    L0 regularization is added only when add_l0 and training (as in the original).
    """
    # TODO(synk): layer-replacement plumbing for Conv1d/Conv2d/GPTConv1D targets and
    #             wrapping an arbitrary HF model forward are not translatable to a kernel.
    logits, l0, sum_sq = masked_linear(
        x, params["weight"], params["mask_weight"], params["bias"], temperature,
        training=training, compute_dtype=compute_dtype, tm=tm, tn=tn, tk=tk,
        out_dtype=out_dtype)
    B, Dout = logits.shape
    loss = 0.5 * sum_sq / (B * Dout)
    if add_l0 and training:
        loss = loss + l0_lambda * l0
    return {"logits": logits, "l0": l0, "loss": loss}


def _reference_forward(x, params, temperature, l0_lambda, training=True):
    s = params["mask_weight"]
    mask = jax.nn.sigmoid(temperature * s) if training else (s > 0.0).astype(jnp.float32)
    y = jnp.dot(x, (params["weight"] * mask).T,
                precision=jax.lax.Precision.HIGHEST) + params["bias"]
    l0 = jnp.sum(mask)
    loss = 0.5 * jnp.mean(y ** 2)
    if training:
        loss = loss + l0_lambda * l0
    return y, l0, loss


if __name__ == "__main__":
    def make_inputs(B, Din, Dout, seed):
        kx, kw, kb, ks = jax.random.split(jax.random.PRNGKey(seed), 4)
        x = jax.random.normal(kx, (B, Din), dtype=jnp.float32)
        params = {
            "weight": jax.random.normal(kw, (Dout, Din), dtype=jnp.float32) * 0.1,
            "bias": jax.random.normal(kb, (Dout,), dtype=jnp.float32) * 0.1,
            "mask_weight": jax.random.normal(ks, (Dout, Din), dtype=jnp.float32) * 0.05,
        }
        return x, params

    # ---- 1) fused path (single batch tile), bf16 MXU, tile-multiple shapes (no padding) ----
    x, params = make_inputs(16, 256, 256, 0)
    ref_y, ref_l0, ref_loss = _reference_forward(x, params, 1.0, 1e-3)
    out = circuit_model_forward(x, params, temperature=1.0)
    logits = jax.block_until_ready(out["logits"])
    assert jnp.allclose(logits, ref_y, atol=5e-2, rtol=5e-2)
    assert jnp.allclose(out["l0"], ref_l0, atol=1e-2, rtol=1e-4)
    assert jnp.allclose(out["loss"], ref_loss, atol=5e-2, rtol=1e-2)

    # ---- 2) streaming path (bf16 masked-weight prepass + MXU hot loop), n_i=2, n_k=2 ----
    out_s = circuit_model_forward(x, params, temperature=1.0, tm=8, tk=128)
    jax.block_until_ready(out_s["logits"])
    assert jnp.allclose(out_s["logits"], ref_y, atol=5e-2, rtol=5e-2)
    assert jnp.allclose(out_s["l0"], ref_l0, atol=1e-2, rtol=1e-4)
    assert jnp.allclose(out_s["loss"], ref_loss, atol=5e-2, rtol=1e-2)

    # ---- 3) non-multiple shapes (padding) + temperature=0 (L0-padding fix), f32 compute ----
    x2, params2 = make_inputs(10, 200, 136, 1)
    ref_y2, ref_l02, ref_loss2 = _reference_forward(x2, params2, 0.0, 1e-3)
    out2 = circuit_model_forward(x2, params2, temperature=0.0,
                                 compute_dtype=jnp.float32, tk=128)
    jax.block_until_ready(out2["logits"])
    assert jnp.allclose(out2["logits"], ref_y2, atol=2e-3, rtol=2e-3)
    assert jnp.allclose(out2["l0"], ref_l02, atol=1e-2, rtol=1e-4)
    assert jnp.allclose(out2["loss"], ref_loss2, atol=2e-3, rtol=2e-3)

    # ---- 4) eval mode: hard (mask_weight > 0) mask, no L0 term in the loss ----
    ref_ye, ref_l0e, ref_losse = _reference_forward(x, params, 1.0, 1e-3, training=False)
    out_e = circuit_model_forward(x, params, temperature=1.0, training=False,
                                  compute_dtype=jnp.float32)
    jax.block_until_ready(out_e["logits"])
    assert jnp.allclose(out_e["logits"], ref_ye, atol=2e-3, rtol=2e-3)
    assert jnp.allclose(out_e["l0"], ref_l0e)
    assert jnp.allclose(out_e["loss"], ref_losse, atol=2e-3, rtol=2e-3)

    print("KERNEL_OK")
</pallas_src>

<mosaic_0001>
module attributes {stable_mosaic.version = 11 : i64} {
  func.func @_fused_masked_matmul_kernel(%arg0: i32, %arg1: i32, %arg2: memref<1xf32, #tpu.memory_space<smem>>, %arg3: memref<16x256xbf16, #tpu.memory_space<vmem>>, %arg4: memref<128x256xf32, #tpu.memory_space<vmem>>, %arg5: memref<128x256xf32, #tpu.memory_space<vmem>>, %arg6: memref<1x128xf32, #tpu.memory_space<vmem>>, %arg7: memref<16x128xf32, #tpu.memory_space<vmem>>, %arg8: memref<1x1x1x1xf32, #tpu.memory_space<vmem>>, %arg9: memref<1x1x1x1xf32, #tpu.memory_space<vmem>>) attributes {dimension_semantics = [#tpu.dimension_semantics<parallel>, #tpu.dimension_semantics<arbitrary>], iteration_bounds = array<i64: 2, 1>, scalar_prefetch = 0 : i64, scratch_operands = 0 : i64, tpu.core_type = #tpu.core_type<tc>, window_params = [{transform_indices = @transform_0, window_bounds = array<i64: 1>}, {transform_indices = @transform_1, window_bounds = array<i64: 16, 256>}, {transform_indices = @transform_2, window_bounds = array<i64: 128, 256>}, {transform_indices = @transform_3, window_bounds = array<i64: 128, 256>}, {transform_indices = @transform_4, window_bounds = array<i64: 1, 128>}, {transform_indices = @transform_5, window_bounds = array<i64: 16, 128>}, {transform_indices = @transform_6, window_bounds = array<i64: 1, 1, 1, 1>}, {transform_indices = @transform_7, window_bounds = array<i64: 1, 1, 1, 1>}]} {
    %c0 = arith.constant 0 : index
    %c0_0 = arith.constant 0 : index
    %0 = vector.load %arg5[%c0, %c0_0] : memref<128x256xf32, #tpu.memory_space<vmem>>, vector<128x256xf32>
    %c0_1 = arith.constant 0 : index
    %1 = memref.load %arg2[%c0_1] : memref<1xf32, #tpu.memory_space<smem>>
    %2 = vector.broadcast %1 : f32 to vector<128x256xf32>
    %3 = arith.mulf %2, %0 : vector<128x256xf32>
    %4 = arith.negf %3 : vector<128x256xf32>
    %5 = math.exp %4 : vector<128x256xf32>
    %cst = arith.constant 1.000000e+00 : f32
    %6 = vector.broadcast %cst : f32 to vector<128x256xf32>
    %7 = arith.addf %6, %5 : vector<128x256xf32>
    %8 = arith.divf %6, %7 : vector<128x256xf32>
    %c0_2 = arith.constant 0 : index
    %c0_3 = arith.constant 0 : index
    %9 = vector.load %arg4[%c0_2, %c0_3] : memref<128x256xf32, #tpu.memory_space<vmem>>, vector<128x256xf32>
    %10 = arith.mulf %9, %8 : vector<128x256xf32>
    %11 = arith.truncf %10 : vector<128x256xf32> to vector<128x256xbf16>
    %12 = vector.shape_cast %8 : vector<128x256xf32> to vector<1x128x256xf32>
    %cst_4 = arith.constant dense<0.000000e+00> : vector<1xf32>
    %13 = vector.multi_reduction <add>, %12, %cst_4 [1, 2] : vector<1x128x256xf32> to vector<1xf32>
    %14 = vector.shape_cast %13 : vector<1xf32> to vector<1x1x1xf32>
    %15 = vector.extract %14[0, 0, 0] : f32 from vector<1x1x1xf32>
    %16 = vector.broadcast %15 : f32 to vector<1x1x1x1xf32>
    %c0_5 = arith.constant 0 : index
    %c0_6 = arith.constant 0 : index
    %c0_7 = arith.constant 0 : index
    %c0_8 = arith.constant 0 : index
    %17 = vector.load %arg8[%c0_5, %c0_6, %c0_7, %c0_8] : memref<1x1x1x1xf32, #tpu.memory_space<vmem>>, vector<1x1x1x1xf32>
    tpu.vector_store %arg8[%c0_5, %c0_6, %c0_7, %c0_8], %16 {strides = array<i32>} : memref<1x1x1x1xf32, #tpu.memory_space<vmem>>, vector<1x1x1x1xf32>,
    %c0_9 = arith.constant 0 : index
    %c0_10 = arith.constant 0 : index
    %18 = vector.load %arg3[%c0_9, %c0_10] : memref<16x256xbf16, #tpu.memory_space<vmem>>, vector<16x256xbf16>
    %cst_11 = arith.constant dense<0.000000e+00> : vector<16x128xf32>
    %19 = tpu.matmul %18, %11, %cst_11 {dimension_numbers = #tpu.dot_dimension_numbers<[1], [1], [0], [0], [0, 0, 1, 0], [], []>} : vector<16x256xbf16>, vector<128x256xbf16>, vector<16x128xf32> -> vector<16x128xf32>
    %c0_12 = arith.constant 0 : index
    %c0_13 = arith.constant 0 : index
    %20 = vector.load %arg6[%c0_12, %c0_13] : memref<1x128xf32, #tpu.memory_space<vmem>>, vector<1x128xf32>
    %21 = vector.broadcast %20 : vector<1x128xf32> to vector<16x128xf32>
    %22 = arith.addf %19, %21 : vector<16x128xf32>
    %c0_14 = arith.constant 0 : index
    %c0_15 = arith.constant 0 : index
    %23 = vector.load %arg7[%c0_14, %c0_15] : memref<16x128xf32, #tpu.memory_space<vmem>>, vector<16x128xf32>
    tpu.vector_store %arg7[%c0_14, %c0_15], %22 {strides = array<i32>} : memref<16x128xf32, #tpu.memory_space<vmem>>, vector<16x128xf32>,
    %24 = arith.mulf %22, %22 : vector<16x128xf32>
    %25 = vector.shape_cast %24 : vector<16x128xf32> to vector<1x16x128xf32>
    %cst_16 = arith.constant dense<0.000000e+00> : vector<1xf32>
    %26 = vector.multi_reduction <add>, %25, %cst_16 [1, 2] : vector<1x16x128xf32> to vector<1xf32>
    %27 = vector.shape_cast %26 : vector<1xf32> to vector<1x1x1xf32>
    %28 = vector.extract %27[0, 0, 0] : f32 from vector<1x1x1xf32>
    %29 = vector.broadcast %28 : f32 to vector<1x1x1x1xf32>
    %c0_17 = arith.constant 0 : index
    %c0_18 = arith.constant 0 : index
    %c0_19 = arith.constant 0 : index
    %c0_20 = arith.constant 0 : index
    %30 = vector.load %arg9[%c0_17, %c0_18, %c0_19, %c0_20] : memref<1x1x1x1xf32, #tpu.memory_space<vmem>>, vector<1x1x1x1xf32>
    tpu.vector_store %arg9[%c0_17, %c0_18, %c0_19, %c0_20], %29 {strides = array<i32>} : memref<1x1x1x1xf32, #tpu.memory_space<vmem>>, vector<1x1x1x1xf32>,
    return
  }
  func.func @transform_0(%arg0: i32, %arg1: i32) -> i32 {
    %c0_i32 = arith.constant 0 : i32
    %c0_i32_0 = arith.constant 0 : i32
    return %c0_i32 : i32
  }
  func.func @transform_1(%arg0: i32, %arg1: i32) -> (i32, i32) {
    %c0_i32 = arith.constant 0 : i32
    %c0_i32_0 = arith.constant 0 : i32
    return %c0_i32, %arg1 : i32, i32
  }
  func.func @transform_2(%arg0: i32, %arg1: i32) -> (i32, i32) {
    %c0_i32 = arith.constant 0 : i32
    return %arg0, %arg1 : i32, i32
  }
  func.func @transform_3(%arg0: i32, %arg1: i32) -> (i32, i32) {
    %c0_i32 = arith.constant 0 : i32
    return %arg0, %arg1 : i32, i32
  }
  func.func @transform_4(%arg0: i32, %arg1: i32) -> (i32, i32) {
    %c0_i32 = arith.constant 0 : i32
    %c0_i32_0 = arith.constant 0 : i32
    return %c0_i32, %arg0 : i32, i32
  }
  func.func @transform_5(%arg0: i32, %arg1: i32) -> (i32, i32) {
    %c0_i32 = arith.constant 0 : i32
    %c0_i32_0 = arith.constant 0 : i32
    return %c0_i32, %arg0 : i32, i32
  }
  func.func @transform_6(%arg0: i32, %arg1: i32) -> (i32, i32, i32, i32) {
    %c0_i32 = arith.constant 0 : i32
    %c0_i32_0 = arith.constant 0 : i32
    %c0_i32_1 = arith.constant 0 : i32
    return %arg0, %arg1, %c0_i32, %c0_i32_0 : i32, i32, i32, i32
  }
  func.func @transform_7(%arg0: i32, %arg1: i32) -> (i32, i32, i32, i32) {
    %c0_i32 = arith.constant 0 : i32
    %c0_i32_0 = arith.constant 0 : i32
    %c0_i32_1 = arith.constant 0 : i32
    %c0_i32_2 = arith.constant 0 : i32
    return %arg0, %c0_i32, %c0_i32_0, %c0_i32_1 : i32, i32, i32, i32
  }
}

</mosaic_0001>

<llo_original>
// kernel: tpu_custom_call.1
$region0: #{tpu_custom_call.1}
  #allocation0 [shape = 'u32[]', space=smem, size = 0x4, offset = 0x4, fixed_abs, tag = 'smem constant byte address 0x4 - core index']
  #allocation1 [shape = 'u32[72,128]{1,0:T(1,128)}', space=vmem, size = 0x9000, scoped, tag = 'internal scratch']
  #allocation2 [shape = 'f32[1]{0:T(128)S(6)}', space=smem, size = 0x200, scoped, tag = 'scoped memory for tpu_custom_call.1']
  %s0 = inlined_call_operand.<no memory space> [shape: f32[1], index: 0, kind: input, shape index: {}]
  %s1 = inlined_call_operand.hbm [shape: bf16[16,256], index: 1, kind: input, shape index: {}]
  %s2 = inlined_call_operand.hbm [shape: f32[256,256], index: 2, kind: input, shape index: {}]
  %s3 = inlined_call_operand.hbm [shape: f32[256,256], index: 3, kind: input, shape index: {}]
  %s4 = inlined_call_operand.vmem [shape: f32[1,256], index: 4, kind: input, shape index: {}]
  %s5 = inlined_call_operand.hbm [shape: f32[16,256], index: 5, kind: output, shape index: {0}]
  %s6 = inlined_call_operand.vmem [shape: f32[2,1,1,1], index: 6, kind: output, shape index: {1}]
  %s7 = inlined_call_operand.vmem [shape: f32[2,1,1,1], index: 7, kind: output, shape index: {2}]
  %8 = xla_tuple %s5, %s6, %s7
  %s9 = sld [smem:[#allocation0]]
  $region81: #{tpu_custom_call.1} parent=0
    _
  %s11 = ssub.s32 1, %s9
  %s12 = scalar_select 0, %s11, %s9
  %13 = sst [smem:[#allocation2]] %s0
  $region1: #{tpu_custom_call.1} parent=0
    #allocation3 [shape = 'u8[8192]{0}', space=vmem, size = 0x2000, scoped, tag = 'input window, operand 1, single buffered']
    #allocation4 [shape = 's32[2]{0}', space=sflag, size = 0x8, scoped, tag = 'scoped memory for tpu_custom_call.1']
    #allocation5 [shape = 's32[2]{0}', space=sflag, size = 0x8, scoped, tag = 'scoped memory for tpu_custom_call.1']
    #allocation6 [shape = 'u8[262144]{0}', space=vmem, size = 0x40000, scoped, tag = 'input window, operand 2']
    #allocation7 [shape = 's32[2]{0}', space=sflag, size = 0x8, scoped, tag = 'scoped memory for tpu_custom_call.1']
    #allocation8 [shape = 'u8[262144]{0}', space=vmem, size = 0x40000, scoped, tag = 'input window, operand 3']
    #allocation9 [shape = 'u8[16384]{0}', space=vmem, size = 0x4000, scoped, tag = 'output window, operand 0']
    %14 = vsyncpa [#allocation4], 0
    %15 = vsyncpa [#allocation7], 0
    %s16 = scalar_lea.sflag [#allocation7], 1
    %17 = vsyncpa %s16, 0
    %18 = vsyncpa [#allocation5], 0
    %s19 = scalar_lea.sflag [#allocation5], 1
    %20 = vsyncpa %s19, 0
    loop: start=0, step=1, limit=4
    $region2: #{tpu_custom_call.1} parent=1 // loop_pre_header
      _
    $region3: #{tpu_custom_call.1} parent=1 // loop_header
      %s22 = sphi 0, %s26
      %p23 = scmp.ge.s32.totalorder %s22, 4
      %s29 = sphi 0, %s41
      %s30 = sphi 0, %s37
      %s31 = sphi 0, %s29
      %s32 = sphi 0, %s30
      %s33 = sphi 0, %s31
      %s34 = sphi 0, %s32
      %s42 = sphi 0, %s42
      %s44 = sphi 0, %s42
      %s45 = sphi 0, %s44
      %s59 = sphi 0, %s45
      %s65 = sphi 0, %s67
      %s68 = sphi 0, %s65
      %s69 = sphi 0, %s68
      %s85 = sphi 0, %s69
      %s93 = sphi 0, %s95
      %s96 = sphi 0, %s93
      %s97 = sphi 0, %s96
      %s113 = sphi 0, %s97
      %s121 = sphi 0, %s123
      %s124 = sphi 0, %s121
      %s125 = sphi 0, %s124
      %s141 = sphi 0, %s125
      %s147 = sphi 0, %s149
      %s150 = sphi 0, %s147
      %s151 = sphi 0, %s150
      %s167 = sphi 0, %s151
      %s173 = sphi 0, %s175
      %s176 = sphi 0, %s173
      %s177 = sphi 0, %s176
      %s193 = sphi 0, %s177
      %s201 = sphi 0, %s203
      %s204 = sphi 0, %s201
      %s205 = sphi 0, %s204
      %s221 = sphi 0, %s205
      %s227 = sphi 0, %s229
      %s230 = sphi 0, %s227
      %s231 = sphi 0, %s230
      %s247 = sphi 0, %s231
    $region4: #{tpu_custom_call.1} parent=1 // loop_header_branch
      %25 = sbr.rel (%p23) target = $region8
    $region5: #{tpu_custom_call.1} parent=1 // loop_body
      %s27 = ssub.s32 %s22, 1
      %s28 = ssub.s32 %s22, 2
      %s35 = sadd.s32 1, %s30
      %p36 = scmp.ge.s32.totalorder %s35, 1
      %s37 = scalar_select %p36, 0, %s35
      %s38 = sadd.s32 1, %s29
      %s39 = scalar_select %p36, %s38, %s29
      %p40 = scmp.ge.s32.totalorder %s39, 2
      %s41 = scalar_select %p40, 0, %s39
      %s43 = sadd.s32 %s42, 1
      %p46 = scmp.eq.s32.totalorder %s22, 1
      %p47 = scmp.ne.s32.totalorder %s42, %s44
      %p48 = scmp.eq.s32.totalorder %s22, 0
      %p49 = por %p47, %p48
      %p50 = scmp.ne.s32.totalorder %s42, %s44
      %p51 = scmp.eq.s32.totalorder %s27, 1
      %p52 = por %p50, %p51
      %p53 = scmp.ne.s32.totalorder %s44, %s45
      %p54 = scmp.eq.s32.totalorder %s27, 0
      %p55 = por %p53, %p54
      %p56 = scmp.ne.s32.totalorder %s44, %s45
      %p57 = scmp.eq.s32.totalorder %s28, 1
      %p58 = por %p56, %p57
      %p60 = scmp.ne.s32.totalorder %s45, %s59
      %p61 = scmp.eq.s32.totalorder %s28, 0
      %p62 = por %p60, %p61
      %s63 = ssub.s32 %s30, %s37
      %p64 = scmp.eq.s32.totalorder %s63, 0
      %s66 = sadd.s32 %s65, 1
      %s67 = scalar_select %p64, %s65, %s66
      %p70 = pneg %p64
      %p71 = scmp.eq.s32.totalorder %s22, 1
      %p72 = por %p70, %p71
      %p73 = scmp.ne.s32.totalorder %s65, %s68
      %p74 = scmp.eq.s32.totalorder %s22, 0
      %p75 = por %p73, %p74
      %p76 = scmp.ne.s32.totalorder %s65, %s68
      %p77 = scmp.eq.s32.totalorder %s27, 1
      %p78 = por %p76, %p77
      %p79 = scmp.ne.s32.totalorder %s68, %s69
      %p80 = scmp.eq.s32.totalorder %s27, 0
      %p81 = por %p79, %p80
      %p82 = scmp.ne.s32.totalorder %s68, %s69
      %p83 = scmp.eq.s32.totalorder %s28, 1
      %p84 = por %p82, %p83
      %p86 = scmp.ne.s32.totalorder %s69, %s85
      %p87 = scmp.eq.s32.totalorder %s28, 0
      %p88 = por %p86, %p87
      %s89 = ssub.s32 %s29, %s41
      %s90 = ssub.s32 %s30, %s37
      %s91 = sor.u32 %s89, %s90
      %p92 = scmp.eq.s32.totalorder %s91, 0
      %s94 = sadd.s32 %s93, 1
      %s95 = scalar_select %p92, %s93, %s94
      %p98 = pneg %p92
      %p99 = scmp.eq.s32.totalorder %s22, 1
      %p100 = por %p98, %p99
      %p101 = scmp.ne.s32.totalorder %s93, %s96
      %p102 = scmp.eq.s32.totalorder %s22, 0
      %p103 = por %p101, %p102
      %p104 = scmp.ne.s32.totalorder %s93, %s96
      %p105 = scmp.eq.s32.totalorder %s27, 1
      %p106 = por %p104, %p105
      %p107 = scmp.ne.s32.totalorder %s96, %s97
      %p108 = scmp.eq.s32.totalorder %s27, 0
      %p109 = por %p107, %p108
      %p110 = scmp.ne.s32.totalorder %s96, %s97
      %p111 = scmp.eq.s32.totalorder %s28, 1
      %p112 = por %p110, %p111
      %p114 = scmp.ne.s32.totalorder %s97, %s113
      %p115 = scmp.eq.s32.totalorder %s28, 0
      %p116 = por %p114, %p115
      %s117 = ssub.s32 %s29, %s41
      %s118 = ssub.s32 %s30, %s37
      %s119 = sor.u32 %s117, %s118
      %p120 = scmp.eq.s32.totalorder %s119, 0
      %s122 = sadd.s32 %s121, 1
      %s123 = scalar_select %p120, %s121, %s122
      %p126 = pneg %p120
      %p127 = scmp.eq.s32.totalorder %s22, 1
      %p128 = por %p126, %p127
      %p129 = scmp.ne.s32.totalorder %s121, %s124
      %p130 = scmp.eq.s32.totalorder %s22, 0
      %p131 = por %p129, %p130
      %p132 = scmp.ne.s32.totalorder %s121, %s124
      %p133 = scmp.eq.s32.totalorder %s27, 1
      %p134 = por %p132, %p133
      %p135 = scmp.ne.s32.totalorder %s124, %s125
      %p136 = scmp.eq.s32.totalorder %s27, 0
      %p137 = por %p135, %p136
      %p138 = scmp.ne.s32.totalorder %s124, %s125
      %p139 = scmp.eq.s32.totalorder %s28, 1
      %p140 = por %p138, %p139
      %p142 = scmp.ne.s32.totalorder %s125, %s141
      %p143 = scmp.eq.s32.totalorder %s28, 0
      %p144 = por %p142, %p143
      %s145 = ssub.s32 %s29, %s41
      %p146 = scmp.eq.s32.totalorder %s145, 0
      %s148 = sadd.s32 %s147, 1
      %s149 = scalar_select %p146, %s147, %s148
      %p152 = pneg %p146
      %p153 = scmp.eq.s32.totalorder %s22, 1
      %p154 = por %p152, %p153
      %p155 = scmp.ne.s32.totalorder %s147, %s150
      %p156 = scmp.eq.s32.totalorder %s22, 0
      %p157 = por %p155, %p156
      %p158 = scmp.ne.s32.totalorder %s147, %s150
      %p159 = scmp.eq.s32.totalorder %s27, 1
      %p160 = por %p158, %p159
      %p161 = scmp.ne.s32.totalorder %s150, %s151
      %p162 = scmp.eq.s32.totalorder %s27, 0
      %p163 = por %p161, %p162
      %p164 = scmp.ne.s32.totalorder %s150, %s151
      %p165 = scmp.eq.s32.totalorder %s28, 1
      %p166 = por %p164, %p165
      %p168 = scmp.ne.s32.totalorder %s151, %s167
      %p169 = scmp.eq.s32.totalorder %s28, 0
      %p170 = por %p168, %p169
      %s171 = ssub.s32 %s29, %s41
      %p172 = scmp.eq.s32.totalorder %s171, 0
      %s174 = sadd.s32 %s173, 1
      %s175 = scalar_select %p172, %s173, %s174
      %p178 = pneg %p172
      %p179 = scmp.eq.s32.totalorder %s22, 1
      %p180 = por %p178, %p179
      %p181 = scmp.ne.s32.totalorder %s173, %s176
      %p182 = scmp.eq.s32.totalorder %s22, 0
      %p183 = por %p181, %p182
      %p184 = scmp.ne.s32.totalorder %s173, %s176
      %p185 = scmp.eq.s32.totalorder %s27, 1
      %p186 = por %p184, %p185
      %p187 = scmp.ne.s32.totalorder %s176, %s177
      %p188 = scmp.eq.s32.totalorder %s27, 0
      %p189 = por %p187, %p188
      %p190 = scmp.ne.s32.totalorder %s176, %s177
      %p191 = scmp.eq.s32.totalorder %s28, 1
      %p192 = por %p190, %p191
      %p194 = scmp.ne.s32.totalorder %s177, %s193
      %p195 = scmp.eq.s32.totalorder %s28, 0
      %p196 = por %p194, %p195
      %s197 = ssub.s32 %s29, %s41
      %s198 = ssub.s32 %s30, %s37
      %s199 = sor.u32 %s197, %s198
      %p200 = scmp.eq.s32.totalorder %s199, 0
      %s202 = sadd.s32 %s201, 1
      %s203 = scalar_select %p200, %s201, %s202
      %p206 = pneg %p200
      %p207 = scmp.eq.s32.totalorder %s22, 1
      %p208 = por %p206, %p207
      %p209 = scmp.ne.s32.totalorder %s201, %s204
      %p210 = scmp.eq.s32.totalorder %s22, 0
      %p211 = por %p209, %p210
      %p212 = scmp.ne.s32.totalorder %s201, %s204
      %p213 = scmp.eq.s32.totalorder %s27, 1
      %p214 = por %p212, %p213
      %p215 = scmp.ne.s32.totalorder %s204, %s205
      %p216 = scmp.eq.s32.totalorder %s27, 0
      %p217 = por %p215, %p216
      %p218 = scmp.ne.s32.totalorder %s204, %s205
      %p219 = scmp.eq.s32.totalorder %s28, 1
      %p220 = por %p218, %p219
      %p222 = scmp.ne.s32.totalorder %s205, %s221
      %p223 = scmp.eq.s32.totalorder %s28, 0
      %p224 = por %p222, %p223
      %s225 = ssub.s32 %s29, %s41
      %p226 = scmp.eq.s32.totalorder %s225, 0
      %s228 = sadd.s32 %s227, 1
      %s229 = scalar_select %p226, %s227, %s228
      %p232 = pneg %p226
      %p233 = scmp.eq.s32.totalorder %s22, 1
      %p234 = por %p232, %p233
      %p235 = scmp.ne.s32.totalorder %s227, %s230
      %p236 = scmp.eq.s32.totalorder %s22, 0
      %p237 = por %p235, %p236
      %p238 = scmp.ne.s32.totalorder %s227, %s230
      %p239 = scmp.eq.s32.totalorder %s27, 1
      %p240 = por %p238, %p239
      %p241 = scmp.ne.s32.totalorder %s230, %s231
      %p242 = scmp.eq.s32.totalorder %s27, 0
      %p243 = por %p241, %p242
      %p244 = scmp.ne.s32.totalorder %s230, %s231
      %p245 = scmp.eq.s32.totalorder %s28, 1
      %p246 = por %p244, %p245
      %p248 = scmp.ne.s32.totalorder %s231, %s247
      %p249 = scmp.eq.s32.totalorder %s28, 0
      %p250 = por %p248, %p249
      %p251 = scmp.le.s32.totalorder 1, %s22
      %p252 = scmp.lt.s32.totalorder %s22, 3
      %p253 = pnand %p251, %p252
      %p254 = pneg %p253
      // Predicated region
      $region9: #{tpu_custom_call.1} parent=5 // pred_check
        _
      $region10: #{tpu_custom_call.1} parent=5 // pred_check_branch
        %256 = sbr.rel (%p253) target = $region12
      $region11: #{tpu_custom_call.1} parent=5 // pred_region
        %s257 = ssub.s32 %s22, 1
        // Predicated region
        $region13: #{tpu_custom_call.1} parent=11 // pred_check
          %p258 = pneg %p55
        $region14: #{tpu_custom_call.1} parent=11 // pred_check_branch
          %260 = sbr.rel (%p258) target = $region16
        $region15: #{tpu_custom_call.1} parent=11 // pred_region
          _
        $region16: #{tpu_custom_call.1} parent=11 // pred_fallthru
          _
        // Predicated region
        $region17: #{tpu_custom_call.1} parent=11 // pred_check
          %p261 = pneg %p81
        $region18: #{tpu_custom_call.1} parent=11 // pred_check_branch
          %263 = sbr.rel (%p261) target = $region20
        $region19: #{tpu_custom_call.1} parent=11 // pred_region
          %s264 = smul.u32 2, %s32
          %266 = vsyncadd [#allocation4], 0
          %s267 = smul.addr %s264, 4
          %s268 = scalar_lea.hbm %s1, %s267
          %s269 = sshll.u32 %s268, 4
          %s270 = int_to_ptr.hbm [resolvable:$true] %s269
          %s271 = sshll.u32 [#allocation3], 4
          %s272 = int_to_ptr.vmem [resolvable:$true] %s271
          %277 = dma.hbm_to_vmem [thread:$0]  %s270, 256, %s272, [#allocation4], 128, 128, 8
        $region20: #{tpu_custom_call.1} parent=11 // pred_fallthru
          _
      $region12: #{tpu_custom_call.1} parent=5 // pred_fallthru
        _
      %p278 = scmp.lt.s32.totalorder %s22, 2
      // Predicated region
      $region21: #{tpu_custom_call.1} parent=5 // pred_check
        %p279 = pneg %p278
      $region22: #{tpu_custom_call.1} parent=5 // pred_check_branch
        %281 = sbr.rel (%p279) target = $region24
      $region23: #{tpu_custom_call.1} parent=5 // pred_region
        // Predicated region
        $region25: #{tpu_custom_call.1} parent=23 // pred_check
          %p282 = pneg %p103
        $region26: #{tpu_custom_call.1} parent=23 // pred_check_branch
          %284 = sbr.rel (%p282) target = $region28
        $region27: #{tpu_custom_call.1} parent=23 // pred_region
          %s285 = sand.u32 %s22, 1
          %s286 = scalar_lea.sflag [#allocation7], %s285
          %s287 = sand.u32 %s93, 1
          %s288 = smul.addr %s287, 256
          %s289 = scalar_lea.vmem [#allocation6], %s288
          %s290 = smul.u32 16, %s29
          %s291 = smul.u32 2, %s30
          %293 = vsyncadd %s286, 0
          %s294 = smul.addr %s290, 2
          %s295 = sadd.s32 %s291, %s294
          %s296 = smul.addr %s295, 8
          %s297 = scalar_lea.hbm %s2, %s296
          %s298 = sshll.u32 %s297, 4
          %s299 = int_to_ptr.hbm [resolvable:$true] %s298
          %s300 = sshll.u32 %s289, 4
          %s301 = int_to_ptr.vmem [resolvable:$true] %s300
          %306 = dma.hbm_to_vmem [thread:$0]  %s299, 4096, %s301, %s286, 256, 256, 16
        $region28: #{tpu_custom_call.1} parent=23 // pred_fallthru
          _
        // Predicated region
        $region29: #{tpu_custom_call.1} parent=23 // pred_check
          %p307 = pneg %p131
        $region30: #{tpu_custom_call.1} parent=23 // pred_check_branch
          %309 = sbr.rel (%p307) target = $region32
        $region31: #{tpu_custom_call.1} parent=23 // pred_region
          %s310 = sand.u32 %s22, 1
          %s311 = scalar_lea.sflag [#allocation7], %s310
          %s312 = sand.u32 %s121, 1
          %s313 = smul.addr %s312, 256
          %s314 = scalar_lea.vmem [#allocation8], %s313
          %s315 = smul.u32 16, %s29
          %s316 = smul.u32 2, %s30
          %318 = vsyncadd %s311, 0
          %s319 = smul.addr %s315, 2
          %s320 = sadd.s32 %s316, %s319
          %s321 = smul.addr %s320, 8
          %s322 = scalar_lea.hbm %s3, %s321
          %s323 = sshll.u32 %s322, 4
          %s324 = int_to_ptr.hbm [resolvable:$true] %s323
          %s325 = sshll.u32 %s314, 4
          %s326 = int_to_ptr.vmem [resolvable:$true] %s325
          %331 = dma.hbm_to_vmem [thread:$0]  %s324, 4096, %s326, %s311, 256, 256, 16
        $region32: #{tpu_custom_call.1} parent=23 // pred_fallthru
          _
        // Predicated region
        $region33: #{tpu_custom_call.1} parent=23 // pred_check
          %p332 = pneg %p157
        $region34: #{tpu_custom_call.1} parent=23 // pred_check_branch
          %334 = sbr.rel (%p332) target = $region36
        $region35: #{tpu_custom_call.1} parent=23 // pred_region
          %p335 = scmp.lt.s32.totalorder %s29, 1
          %s336 = scalar_select %p335, %s29, 1
          %s337 = scalar_lea.vmem %s4, %s336
        $region36: #{tpu_custom_call.1} parent=23 // pred_fallthru
          _
      $region24: #{tpu_custom_call.1} parent=5 // pred_fallthru
        _
      %p338 = scmp.le.s32.totalorder 1, %s22
      %p339 = scmp.lt.s32.totalorder %s22, 3
      %p340 = pnand %p338, %p339
      %p341 = pneg %p340
      // Predicated region
      $region37: #{tpu_custom_call.1} parent=5 // pred_check
        _
      $region38: #{tpu_custom_call.1} parent=5 // pred_check_branch
        %343 = sbr.rel (%p340) target = $region40
      $region39: #{tpu_custom_call.1} parent=5 // pred_region
        %s344 = ssub.s32 %s22, 1
        // Predicated region
        $region41: #{tpu_custom_call.1} parent=39 // pred_check
          %p345 = pneg %p81
        $region42: #{tpu_custom_call.1} parent=39 // pred_check_branch
          %347 = sbr.rel (%p345) target = $region44
        $region43: #{tpu_custom_call.1} parent=39 // pred_region
          %349 = dma.done [#allocation4], 256
        $region44: #{tpu_custom_call.1} parent=39 // pred_fallthru
          _
        %s350 = sand.u32 %s27, 1
        %s351 = scalar_lea.sflag [#allocation7], %s350
        %s352 = sand.u32 %s96, 1
        %s353 = smul.addr %s352, 256
        %s354 = scalar_lea.vmem [#allocation6], %s353
        // Predicated region
        $region45: #{tpu_custom_call.1} parent=39 // pred_check
          %p355 = pneg %p109
        $region46: #{tpu_custom_call.1} parent=39 // pred_check_branch
          %357 = sbr.rel (%p355) target = $region48
        $region47: #{tpu_custom_call.1} parent=39 // pred_region
          %359 = dma.done %s351, 4096
        $region48: #{tpu_custom_call.1} parent=39 // pred_fallthru
          _
        %s360 = sand.u32 %s27, 1
        %s361 = scalar_lea.sflag [#allocation7], %s360
        %s362 = sand.u32 %s124, 1
        %s363 = smul.addr %s362, 256
        %s364 = scalar_lea.vmem [#allocation8], %s363
        // Predicated region
        $region49: #{tpu_custom_call.1} parent=39 // pred_check
          %p365 = pneg %p137
        $region50: #{tpu_custom_call.1} parent=39 // pred_check_branch
          %367 = sbr.rel (%p365) target = $region52
        $region51: #{tpu_custom_call.1} parent=39 // pred_region
          %369 = dma.done %s361, 4096
        $region52: #{tpu_custom_call.1} parent=39 // pred_fallthru
          _
        %p370 = pneg %p55
        %p371 = pneg %p52
        %p372 = pneg %p81
        %p373 = pneg %p78
        %s374 = sand.u32 %s27, 1
        %s375 = scalar_lea.sflag [#allocation7], %s374
        %s376 = sand.u32 %s96, 1
        %s377 = smul.addr %s376, 256
        %s378 = scalar_lea.vmem [#allocation6], %s377
        %p379 = pneg %p109
        %p380 = pneg %p106
        %s381 = sand.u32 %s27, 1
        %s382 = scalar_lea.sflag [#allocation7], %s381
        %s383 = sand.u32 %s124, 1
        %s384 = smul.addr %s383, 256
        %s385 = scalar_lea.vmem [#allocation8], %s384
        %p386 = pneg %p137
        %p387 = pneg %p134
        %p388 = scmp.lt.s32.totalorder %s31, 1
        %s389 = scalar_select %p388, %s31, 1
        %s390 = scalar_lea.vmem %s4, %s389
        %p391 = pneg %p163
        %p392 = pneg %p160
        %p393 = pneg %p189
        %p394 = pneg %p186
        %s395 = sand.u32 %s176, 1
        %s396 = scalar_lea.sflag [#allocation5], %s395
        %s397 = sand.u32 %s176, 1
        %s398 = smul.addr %s397, 16
        %s399 = scalar_lea.vmem [#allocation9], %s398
        %p400 = pneg %p217
        %p401 = pneg %p214
        %p402 = scmp.lt.s32.totalorder %s31, 1
        %s403 = scalar_select %p402, %s31, 1
        %p404 = scmp.lt.s32.totalorder %s32, 0
        %s405 = scalar_select %p404, %s32, 0
        %s406 = sadd.s32 %s405, %s403
        %s407 = scalar_lea.vmem %s6, %s406
        %p408 = pneg %p243
        %p409 = pneg %p240
        %p410 = scmp.lt.s32.totalorder %s31, 1
        %s411 = scalar_select %p410, %s31, 1
        %s412 = scalar_lea.vmem %s7, %s411
        %s413 = smul.u32 2, %s32
        %s414 = smul.u32 16, %s31
        %s415 = smul.u32 2, %s32
        %s416 = smul.u32 16, %s31
        %s417 = smul.u32 2, %s32
        %p418 = scmp.lt.s32.totalorder %s31, 1
        %s419 = scalar_select %p418, %s31, 1
        %s420 = scalar_lea.vmem %s4, %s419
        %p421 = scmp.lt.s32.totalorder %s31, 1
        %s422 = scalar_select %p421, %s31, 1
        %p423 = scmp.lt.s32.totalorder %s32, 0
        %s424 = scalar_select %p423, %s32, 0
        %s425 = sadd.s32 %s424, %s422
        %s426 = scalar_lea.vmem %s6, %s425
        %p427 = scmp.lt.s32.totalorder %s31, 1
        %s428 = scalar_select %p427, %s31, 1
        %s429 = scalar_lea.vmem %s7, %s428
        %v430 = vld [vmem:[%s364] sm:$0xff]
        %v431 = vld [vmem:[%s364 + $0x8] sm:$0xff]
        %v432 = vld [vmem:[%s364 + $0x10] sm:$0xff]
        %v433 = vld [vmem:[%s364 + $0x18] sm:$0xff]
        %v434 = vld [vmem:[%s364 + $0x20] sm:$0xff]
        %v435 = vld [vmem:[%s364 + $0x28] sm:$0xff]
        %v436 = vld [vmem:[%s364 + $0x30] sm:$0xff]
        %v437 = vld [vmem:[%s364 + $0x38] sm:$0xff]
        %v438 = vld [vmem:[%s364 + $0x40] sm:$0xff]
        %v439 = vld [vmem:[%s364 + $0x48] sm:$0xff]
        %v440 = vld [vmem:[%s364 + $0x50] sm:$0xff]
        %v441 = vld [vmem:[%s364 + $0x58] sm:$0xff]
        %v442 = vld [vmem:[%s364 + $0x60] sm:$0xff]
        %v443 = vld [vmem:[%s364 + $0x68] sm:$0xff]
        %v444 = vld [vmem:[%s364 + $0x70] sm:$0xff]
        %v445 = vld [vmem:[%s364 + $0x78] sm:$0xff]
        %v446 = vld [vmem:[%s364 + $0x80] sm:$0xff]
        %v447 = vld [vmem:[%s364 + $0x88] sm:$0xff]
        %v448 = vld [vmem:[%s364 + $0x90] sm:$0xff]
        %v449 = vld [vmem:[%s364 + $0x98] sm:$0xff]
        %v450 = vld [vmem:[%s364 + $0xa0] sm:$0xff]
        %v451 = vld [vmem:[%s364 + $0xa8] sm:$0xff]
        %v452 = vld [vmem:[%s364 + $0xb0] sm:$0xff]
        %v453 = vld [vmem:[%s364 + $0xb8] sm:$0xff]
        %v454 = vld [vmem:[%s364 + $0xc0] sm:$0xff]
        %v455 = vld [vmem:[%s364 + $0xc8] sm:$0xff]
        %v456 = vld [vmem:[%s364 + $0xd0] sm:$0xff]
        %v457 = vld [vmem:[%s364 + $0xd8] sm:$0xff]
        %v458 = vld [vmem:[%s364 + $0xe0] sm:$0xff]
        %v459 = vld [vmem:[%s364 + $0xe8] sm:$0xff]
        %v460 = vld [vmem:[%s364 + $0xf0] sm:$0xff]
        %v461 = vld [vmem:[%s364 + $0xf8] sm:$0xff]
        %s462 = sld [smem:[#allocation2]]
        %v463 = vstv %s462
        %v464 = vmul.f32 %v463, %v430
        %v465 = vmul.f32 %v463, %v431
        %v466 = vmul.f32 %v463, %v432
        %v467 = vmul.f32 %v463, %v433
        %v468 = vmul.f32 %v463, %v434
        %v469 = vmul.f32 %v463, %v435
        %v470 = vmul.f32 %v463, %v436
        %v471 = vmul.f32 %v463, %v437
        %v472 = vmul.f32 %v463, %v438
        %v473 = vmul.f32 %v463, %v439
        %v474 = vmul.f32 %v463, %v440
        %v475 = vmul.f32 %v463, %v441
        %v476 = vmul.f32 %v463, %v442
        %v477 = vmul.f32 %v463, %v443
        %v478 = vmul.f32 %v463, %v444
        %v479 = vmul.f32 %v463, %v445
        %v480 = vmul.f32 %v463, %v446
        %v481 = vmul.f32 %v463, %v447
        %v482 = vmul.f32 %v463, %v448
        %v483 = vmul.f32 %v463, %v449
        %v484 = vmul.f32 %v463, %v450
        %v485 = vmul.f32 %v463, %v451
        %v486 = vmul.f32 %v463, %v452
        %v487 = vmul.f32 %v463, %v453
        %v488 = vmul.f32 %v463, %v454
        %v489 = vmul.f32 %v463, %v455
        %v490 = vmul.f32 %v463, %v456
        %v491 = vmul.f32 %v463, %v457
        %v492 = vmul.f32 %v463, %v458
        %v493 = vmul.f32 %v463, %v459
        %v494 = vmul.f32 %v463, %v460
        %v495 = vmul.f32 %v463, %v461
        %v496 = vxor.u32 %v464, 2147483648
        %v497 = vxor.u32 %v465, 2147483648
        %v498 = vxor.u32 %v466, 2147483648
        %v499 = vxor.u32 %v467, 2147483648
        %v500 = vxor.u32 %v468, 2147483648
        %v501 = vxor.u32 %v469, 2147483648
        %v502 = vxor.u32 %v470, 2147483648
        %v503 = vxor.u32 %v471, 2147483648
        %v504 = vxor.u32 %v472, 2147483648
        %v505 = vxor.u32 %v473, 2147483648
        %v506 = vxor.u32 %v474, 2147483648
        %v507 = vxor.u32 %v475, 2147483648
        %v508 = vxor.u32 %v476, 2147483648
        %v509 = vxor.u32 %v477, 2147483648
        %v510 = vxor.u32 %v478, 2147483648
        %v511 = vxor.u32 %v479, 2147483648
        %v512 = vxor.u32 %v480, 2147483648
        %v513 = vxor.u32 %v481, 2147483648
        %v514 = vxor.u32 %v482, 2147483648
        %v515 = vxor.u32 %v483, 2147483648
        %v516 = vxor.u32 %v484, 2147483648
        %v517 = vxor.u32 %v485, 2147483648
        %v518 = vxor.u32 %v486, 2147483648
        %v519 = vxor.u32 %v487, 2147483648
        %v520 = vxor.u32 %v488, 2147483648
        %v521 = vxor.u32 %v489, 2147483648
        %v522 = vxor.u32 %v490, 2147483648
        %v523 = vxor.u32 %v491, 2147483648
        %v524 = vxor.u32 %v492, 2147483648
        %v525 = vxor.u32 %v493, 2147483648
        %v526 = vxor.u32 %v494, 2147483648
        %v527 = vxor.u32 %v495, 2147483648
        %v528 = vmul.f32 %v496, 1.442695
        %v529 = vpow.pop %v528
        %v530 = vmul.f32 %v497, 1.442695
        %v531 = vpow.pop %v530
        %v532 = vmul.f32 %v498, 1.442695
        %v533 = vpow.pop %v532
        %v534 = vmul.f32 %v499, 1.442695
        %v535 = vpow.pop %v534
        %v536 = vmul.f32 %v500, 1.442695
        %v537 = vpow.pop %v536
        %v538 = vmul.f32 %v501, 1.442695
        %v539 = vpow.pop %v538
        %v540 = vmul.f32 %v502, 1.442695
        %v541 = vpow.pop %v540
        %v542 = vmul.f32 %v503, 1.442695
        %v543 = vpow.pop %v542
        %v544 = vmul.f32 %v504, 1.442695
        %v545 = vpow.pop %v544
        %v546 = vmul.f32 %v505, 1.442695
        %v547 = vpow.pop %v546
        %v548 = vmul.f32 %v506, 1.442695
        %v549 = vpow.pop %v548
        %v550 = vmul.f32 %v507, 1.442695
        %v551 = vpow.pop %v550
        %v552 = vmul.f32 %v508, 1.442695
        %v553 = vpow.pop %v552
        %v554 = vmul.f32 %v509, 1.442695
        %v555 = vpow.pop %v554
        %v556 = vmul.f32 %v510, 1.442695
        %v557 = vpow.pop %v556
        %v558 = vmul.f32 %v511, 1.442695
        %v559 = vpow.pop %v558
        %v560 = vmul.f32 %v512, 1.442695
        %v561 = vpow.pop %v560
        %v562 = vmul.f32 %v513, 1.442695
        %v563 = vpow.pop %v562
        %v564 = vmul.f32 %v514, 1.442695
        %v565 = vpow.pop %v564
        %v566 = vmul.f32 %v515, 1.442695
        %v567 = vpow.pop %v566
        %v568 = vmul.f32 %v516, 1.442695
        %v569 = vpow.pop %v568
        %v570 = vmul.f32 %v517, 1.442695
        %v571 = vpow.pop %v570
        %v572 = vmul.f32 %v518, 1.442695
        %v573 = vpow.pop %v572
        %v574 = vmul.f32 %v519, 1.442695
        %v575 = vpow.pop %v574
        %v576 = vmul.f32 %v520, 1.442695
        %v577 = vpow.pop %v576
        %v578 = vmul.f32 %v521, 1.442695
        %v579 = vpow.pop %v578
        %v580 = vmul.f32 %v522, 1.442695
        %v581 = vpow.pop %v580
        %v582 = vmul.f32 %v523, 1.442695
        %v583 = vpow.pop %v582
        %v584 = vmul.f32 %v524, 1.442695
        %v585 = vpow.pop %v584
        %v586 = vmul.f32 %v525, 1.442695
        %v587 = vpow.pop %v586
        %v588 = vmul.f32 %v526, 1.442695
        %v589 = vpow.pop %v588
        %v590 = vmul.f32 %v527, 1.442695
        %v591 = vpow.pop %v590
        %v592 = vadd.f32 %v529, 1.0
        %v593 = vadd.f32 %v531, 1.0
        %v594 = vadd.f32 %v533, 1.0
        %v595 = vadd.f32 %v535, 1.0
        %v596 = vadd.f32 %v537, 1.0
        %v597 = vadd.f32 %v539, 1.0
        %v598 = vadd.f32 %v541, 1.0
        %v599 = vadd.f32 %v543, 1.0
        %v600 = vadd.f32 %v545, 1.0
        %v601 = vadd.f32 %v547, 1.0
        %v602 = vadd.f32 %v549, 1.0
        %v603 = vadd.f32 %v551, 1.0
        %v604 = vadd.f32 %v553, 1.0
        %v605 = vadd.f32 %v555, 1.0
        %v606 = vadd.f32 %v557, 1.0
        %v607 = vadd.f32 %v559, 1.0
        %v608 = vadd.f32 %v561, 1.0
        %v609 = vadd.f32 %v563, 1.0
        %v610 = vadd.f32 %v565, 1.0
        %v611 = vadd.f32 %v567, 1.0
        %v612 = vadd.f32 %v569, 1.0
        %v613 = vadd.f32 %v571, 1.0
        %v614 = vadd.f32 %v573, 1.0
        %v615 = vadd.f32 %v575, 1.0
        %v616 = vadd.f32 %v577, 1.0
        %v617 = vadd.f32 %v579, 1.0
        %v618 = vadd.f32 %v581, 1.0
        %v619 = vadd.f32 %v583, 1.0
        %v620 = vadd.f32 %v585, 1.0
        %v621 = vadd.f32 %v587, 1.0
        %v622 = vadd.f32 %v589, 1.0
        %v623 = vadd.f32 %v591, 1.0
        %v624 = vrcp.pop %v592
        %v625 = vmul.f32 %v592, %v624
        %v626 = vsub.f32 1.0, %v625
        %v627 = vmul.f32 %v624, %v626
        %v628 = vadd.f32 %v624, %v627
        %vm629 = vweird.f32 %v592
        %vm630 = vweird.f32 %v624
        %vm631 = vmor %vm629, %vm630
        %v632 = vsel %vm631, %v624, %v628
        %v633 = vand.u32 2147483647, %v592
        %vm634 = vcmp.eq.f32.partialorder %v633, 8.507059e+37
        %v635 = vand.u32 %v592, 2147483648
        %v636 = vor.u32 1.1754944e-38, %v635
        %v637 = vsel %vm634, %v636, %v632
        %v638 = vmul.f32 1.0, %v637
        %v639 = vrcp.pop %v593
        %v640 = vmul.f32 %v593, %v639
        %v641 = vsub.f32 1.0, %v640
        %v642 = vmul.f32 %v639, %v641
        %v643 = vadd.f32 %v639, %v642
        %vm644 = vweird.f32 %v593
        %vm645 = vweird.f32 %v639
        %vm646 = vmor %vm644, %vm645
        %v647 = vsel %vm646, %v639, %v643
        %v648 = vand.u32 2147483647, %v593
        %vm649 = vcmp.eq.f32.partialorder %v648, 8.507059e+37
        %v650 = vand.u32 %v593, 2147483648
        %v651 = vor.u32 1.1754944e-38, %v650
        %v652 = vsel %vm649, %v651, %v647
        %v653 = vmul.f32 1.0, %v652
        %v654 = vrcp.pop %v594
        %v655 = vmul.f32 %v594, %v654
        %v656 = vsub.f32 1.0, %v655
        %v657 = vmul.f32 %v654, %v656
        %v658 = vadd.f32 %v654, %v657
        %vm659 = vweird.f32 %v594
        %vm660 = vweird.f32 %v654
        %vm661 = vmor %vm659, %vm660
        %v662 = vsel %vm661, %v654, %v658
        %v663 = vand.u32 2147483647, %v594
        %vm664 = vcmp.eq.f32.partialorder %v663, 8.507059e+37
        %v665 = vand.u32 %v594, 2147483648
        %v666 = vor.u32 1.1754944e-38, %v665
        %v667 = vsel %vm664, %v666, %v662
        %v668 = vmul.f32 1.0, %v667
        %v669 = vrcp.pop %v595
        %v670 = vmul.f32 %v595, %v669
        %v671 = vsub.f32 1.0, %v670
        %v672 = vmul.f32 %v669, %v671
        %v673 = vadd.f32 %v669, %v672
        %vm674 = vweird.f32 %v595
        %vm675 = vweird.f32 %v669
        %vm676 = vmor %vm674, %vm675
        %v677 = vsel %vm676, %v669, %v673
        %v678 = vand.u32 2147483647, %v595
        %vm679 = vcmp.eq.f32.partialorder %v678, 8.507059e+37
        %v680 = vand.u32 %v595, 2147483648
        %v681 = vor.u32 1.1754944e-38, %v680
        %v682 = vsel %vm679, %v681, %v677
        %v683 = vmul.f32 1.0, %v682
        %v684 = vrcp.pop %v596
        %v685 = vmul.f32 %v596, %v684
        %v686 = vsub.f32 1.0, %v685
        %v687 = vmul.f32 %v684, %v686
        %v688 = vadd.f32 %v684, %v687
        %vm689 = vweird.f32 %v596
        %vm690 = vweird.f32 %v684
        %vm691 = vmor %vm689, %vm690
        %v692 = vsel %vm691, %v684, %v688
        %v693 = vand.u32 2147483647, %v596
        %vm694 = vcmp.eq.f32.partialorder %v693, 8.507059e+37
        %v695 = vand.u32 %v596, 2147483648
        %v696 = vor.u32 1.1754944e-38, %v695
        %v697 = vsel %vm694, %v696, %v692
        %v698 = vmul.f32 1.0, %v697
        %v699 = vrcp.pop %v597
        %v700 = vmul.f32 %v597, %v699
        %v701 = vsub.f32 1.0, %v700
        %v702 = vmul.f32 %v699, %v701
        %v703 = vadd.f32 %v699, %v702
        %vm704 = vweird.f32 %v597
        %vm705 = vweird.f32 %v699
        %vm706 = vmor %vm704, %vm705
        %v707 = vsel %vm706, %v699, %v703
        %v708 = vand.u32 2147483647, %v597
        %vm709 = vcmp.eq.f32.partialorder %v708, 8.507059e+37
        %v710 = vand.u32 %v597, 2147483648
        %v711 = vor.u32 1.1754944e-38, %v710
        %v712 = vsel %vm709, %v711, %v707
        %v713 = vmul.f32 1.0, %v712
        %v714 = vrcp.pop %v598
        %v715 = vmul.f32 %v598, %v714
        %v716 = vsub.f32 1.0, %v715
        %v717 = vmul.f32 %v714, %v716
        %v718 = vadd.f32 %v714, %v717
        %vm719 = vweird.f32 %v598
        %vm720 = vweird.f32 %v714
        %vm721 = vmor %vm719, %vm720
        %v722 = vsel %vm721, %v714, %v718
        %v723 = vand.u32 2147483647, %v598
        %vm724 = vcmp.eq.f32.partialorder %v723, 8.507059e+37
        %v725 = vand.u32 %v598, 2147483648
        %v726 = vor.u32 1.1754944e-38, %v725
        %v727 = vsel %vm724, %v726, %v722
        %v728 = vmul.f32 1.0, %v727
        %v729 = vrcp.pop %v599
        %v730 = vmul.f32 %v599, %v729
        %v731 = vsub.f32 1.0, %v730
        %v732 = vmul.f32 %v729, %v731
        %v733 = vadd.f32 %v729, %v732
        %vm734 = vweird.f32 %v599
        %vm735 = vweird.f32 %v729
        %vm736 = vmor %vm734, %vm735
        %v737 = vsel %vm736, %v729, %v733
        %v738 = vand.u32 2147483647, %v599
        %vm739 = vcmp.eq.f32.partialorder %v738, 8.507059e+37
        %v740 = vand.u32 %v599, 2147483648
        %v741 = vor.u32 1.1754944e-38, %v740
        %v742 = vsel %vm739, %v741, %v737
        %v743 = vmul.f32 1.0, %v742
        %v744 = vrcp.pop %v600
        %v745 = vmul.f32 %v600, %v744
        %v746 = vsub.f32 1.0, %v745
        %v747 = vmul.f32 %v744, %v746
        %v748 = vadd.f32 %v744, %v747
        %vm749 = vweird.f32 %v600
        %vm750 = vweird.f32 %v744
        %vm751 = vmor %vm749, %vm750
        %v752 = vsel %vm751, %v744, %v748
        %v753 = vand.u32 2147483647, %v600
        %vm754 = vcmp.eq.f32.partialorder %v753, 8.507059e+37
        %v755 = vand.u32 %v600, 2147483648
        %v756 = vor.u32 1.1754944e-38, %v755
        %v757 = vsel %vm754, %v756, %v752
        %v758 = vmul.f32 1.0, %v757
        %v759 = vrcp.pop %v601
        %v760 = vmul.f32 %v601, %v759
        %v761 = vsub.f32 1.0, %v760
        %v762 = vmul.f32 %v759, %v761
        %v763 = vadd.f32 %v759, %v762
        %vm764 = vweird.f32 %v601
        %vm765 = vweird.f32 %v759
        %vm766 = vmor %vm764, %vm765
        %v767 = vsel %vm766, %v759, %v763
        %v768 = vand.u32 2147483647, %v601
        %vm769 = vcmp.eq.f32.partialorder %v768, 8.507059e+37
        %v770 = vand.u32 %v601, 2147483648
        %v771 = vor.u32 1.1754944e-38, %v770
        %v772 = vsel %vm769, %v771, %v767
        %v773 = vmul.f32 1.0, %v772
        %v774 = vrcp.pop %v602
        %v775 = vmul.f32 %v602, %v774
        %v776 = vsub.f32 1.0, %v775
        %v777 = vmul.f32 %v774, %v776
        %v778 = vadd.f32 %v774, %v777
        %vm779 = vweird.f32 %v602
        %vm780 = vweird.f32 %v774
        %vm781 = vmor %vm779, %vm780
        %v782 = vsel %vm781, %v774, %v778
        %v783 = vand.u32 2147483647, %v602
        %vm784 = vcmp.eq.f32.partialorder %v783, 8.507059e+37
        %v785 = vand.u32 %v602, 2147483648
        %v786 = vor.u32 1.1754944e-38, %v785
        %v787 = vsel %vm784, %v786, %v782
        %v788 = vmul.f32 1.0, %v787
        %v789 = vrcp.pop %v603
        %v790 = vmul.f32 %v603, %v789
        %v791 = vsub.f32 1.0, %v790
        %v792 = vmul.f32 %v789, %v791
        %v793 = vadd.f32 %v789, %v792
        %vm794 = vweird.f32 %v603
        %vm795 = vweird.f32 %v789
        %vm796 = vmor %vm794, %vm795
        %v797 = vsel %vm796, %v789, %v793
        %v798 = vand.u32 2147483647, %v603
        %vm799 = vcmp.eq.f32.partialorder %v798, 8.507059e+37
        %v800 = vand.u32 %v603, 2147483648
        %v801 = vor.u32 1.1754944e-38, %v800
        %v802 = vsel %vm799, %v801, %v797
        %v803 = vmul.f32 1.0, %v802
        %v804 = vrcp.pop %v604
        %v805 = vmul.f32 %v604, %v804
        %v806 = vsub.f32 1.0, %v805
        %v807 = vmul.f32 %v804, %v806
        %v808 = vadd.f32 %v804, %v807
        %vm809 = vweird.f32 %v604
        %vm810 = vweird.f32 %v804
        %vm811 = vmor %vm809, %vm810
        %v812 = vsel %vm811, %v804, %v808
        %v813 = vand.u32 2147483647, %v604
        %vm814 = vcmp.eq.f32.partialorder %v813, 8.507059e+37
        %v815 = vand.u32 %v604, 2147483648
        %v816 = vor.u32 1.1754944e-38, %v815
        %v817 = vsel %vm814, %v816, %v812
        %v818 = vmul.f32 1.0, %v817
        %v819 = vrcp.pop %v605
        %v820 = vmul.f32 %v605, %v819
        %v821 = vsub.f32 1.0, %v820
        %v822 = vmul.f32 %v819, %v821
        %v823 = vadd.f32 %v819, %v822
        %vm824 = vweird.f32 %v605
        %vm825 = vweird.f32 %v819
        %vm826 = vmor %vm824, %vm825
        %v827 = vsel %vm826, %v819, %v823
        %v828 = vand.u32 2147483647, %v605
        %vm829 = vcmp.eq.f32.partialorder %v828, 8.507059e+37
        %v830 = vand.u32 %v605, 2147483648
        %v831 = vor.u32 1.1754944e-38, %v830
        %v832 = vsel %vm829, %v831, %v827
        %v833 = vmul.f32 1.0, %v832
        %v834 = vrcp.pop %v606
        %v835 = vmul.f32 %v606, %v834
        %v836 = vsub.f32 1.0, %v835
        %v837 = vmul.f32 %v834, %v836
        %v838 = vadd.f32 %v834, %v837
        %vm839 = vweird.f32 %v606
        %vm840 = vweird.f32 %v834
        %vm841 = vmor %vm839, %vm840
        %v842 = vsel %vm841, %v834, %v838
        %v843 = vand.u32 2147483647, %v606
        %vm844 = vcmp.eq.f32.partialorder %v843, 8.507059e+37
        %v845 = vand.u32 %v606, 2147483648
        %v846 = vor.u32 1.1754944e-38, %v845
        %v847 = vsel %vm844, %v846, %v842
        %v848 = vmul.f32 1.0, %v847
        %v849 = vrcp.pop %v607
        %v850 = vmul.f32 %v607, %v849
        %v851 = vsub.f32 1.0, %v850
        %v852 = vmul.f32 %v849, %v851
        %v853 = vadd.f32 %v849, %v852
        %vm854 = vweird.f32 %v607
        %vm855 = vweird.f32 %v849
        %vm856 = vmor %vm854, %vm855
        %v857 = vsel %vm856, %v849, %v853
        %v858 = vand.u32 2147483647, %v607
        %vm859 = vcmp.eq.f32.partialorder %v858, 8.507059e+37
        %v860 = vand.u32 %v607, 2147483648
        %v861 = vor.u32 1.1754944e-38, %v860
        %v862 = vsel %vm859, %v861, %v857
        %v863 = vmul.f32 1.0, %v862
        %v864 = vrcp.pop %v608
        %v865 = vmul.f32 %v608, %v864
        %v866 = vsub.f32 1.0, %v865
        %v867 = vmul.f32 %v864, %v866
        %v868 = vadd.f32 %v864, %v867
        %vm869 = vweird.f32 %v608
        %vm870 = vweird.f32 %v864
        %vm871 = vmor %vm869, %vm870
        %v872 = vsel %vm871, %v864, %v868
        %v873 = vand.u32 2147483647, %v608
        %vm874 = vcmp.eq.f32.partialorder %v873, 8.507059e+37
        %v875 = vand.u32 %v608, 2147483648
        %v876 = vor.u32 1.1754944e-38, %v875
        %v877 = vsel %vm874, %v876, %v872
        %v878 = vmul.f32 1.0, %v877
        %v879 = vrcp.pop %v609
        %v880 = vmul.f32 %v609, %v879
        %v881 = vsub.f32 1.0, %v880
        %v882 = vmul.f32 %v879, %v881
        %v883 = vadd.f32 %v879, %v882
        %vm884 = vweird.f32 %v609
        %vm885 = vweird.f32 %v879
        %vm886 = vmor %vm884, %vm885
        %v887 = vsel %vm886, %v879, %v883
        %v888 = vand.u32 2147483647, %v609
        %vm889 = vcmp.eq.f32.partialorder %v888, 8.507059e+37
        %v890 = vand.u32 %v609, 2147483648
        %v891 = vor.u32 1.1754944e-38, %v890
        %v892 = vsel %vm889, %v891, %v887
        %v893 = vmul.f32 1.0, %v892
        %v894 = vrcp.pop %v610
        %v895 = vmul.f32 %v610, %v894
        %v896 = vsub.f32 1.0, %v895
        %v897 = vmul.f32 %v894, %v896
        %v898 = vadd.f32 %v894, %v897
        %vm899 = vweird.f32 %v610
        %vm900 = vweird.f32 %v894
        %vm901 = vmor %vm899, %vm900
        %v902 = vsel %vm901, %v894, %v898
        %v903 = vand.u32 2147483647, %v610
        %vm904 = vcmp.eq.f32.partialorder %v903, 8.507059e+37
        %v905 = vand.u32 %v610, 2147483648
        %v906 = vor.u32 1.1754944e-38, %v905
        %v907 = vsel %vm904, %v906, %v902
        %v908 = vmul.f32 1.0, %v907
        %v909 = vrcp.pop %v611
        %v910 = vmul.f32 %v611, %v909
        %v911 = vsub.f32 1.0, %v910
        %v912 = vmul.f32 %v909, %v911
        %v913 = vadd.f32 %v909, %v912
        %vm914 = vweird.f32 %v611
        %vm915 = vweird.f32 %v909
        %vm916 = vmor %vm914, %vm915
        %v917 = vsel %vm916, %v909, %v913
        %v918 = vand.u32 2147483647, %v611
        %vm919 = vcmp.eq.f32.partialorder %v918, 8.507059e+37
        %v920 = vand.u32 %v611, 2147483648
        %v921 = vor.u32 1.1754944e-38, %v920
        %v922 = vsel %vm919, %v921, %v917
        %v923 = vmul.f32 1.0, %v922
        %v924 = vrcp.pop %v612
        %v925 = vmul.f32 %v612, %v924
        %v926 = vsub.f32 1.0, %v925
        %v927 = vmul.f32 %v924, %v926
        %v928 = vadd.f32 %v924, %v927
        %vm929 = vweird.f32 %v612
        %vm930 = vweird.f32 %v924
        %vm931 = vmor %vm929, %vm930
        %v932 = vsel %vm931, %v924, %v928
        %v933 = vand.u32 2147483647, %v612
        %vm934 = vcmp.eq.f32.partialorder %v933, 8.507059e+37
        %v935 = vand.u32 %v612, 2147483648
        %v936 = vor.u32 1.1754944e-38, %v935
        %v937 = vsel %vm934, %v936, %v932
        %v938 = vmul.f32 1.0, %v937
        %v939 = vrcp.pop %v613
        %v940 = vmul.f32 %v613, %v939
        %v941 = vsub.f32 1.0, %v940
        %v942 = vmul.f32 %v939, %v941
        %v943 = vadd.f32 %v939, %v942
        %vm944 = vweird.f32 %v613
        %vm945 = vweird.f32 %v939
        %vm946 = vmor %vm944, %vm945
        %v947 = vsel %vm946, %v939, %v943
        %v948 = vand.u32 2147483647, %v613
        %vm949 = vcmp.eq.f32.partialorder %v948, 8.507059e+37
        %v950 = vand.u32 %v613, 2147483648
        %v951 = vor.u32 1.1754944e-38, %v950
        %v952 = vsel %vm949, %v951, %v947
        %v953 = vmul.f32 1.0, %v952
        %v954 = vrcp.pop %v614
        %v955 = vmul.f32 %v614, %v954
        %v956 = vsub.f32 1.0, %v955
        %v957 = vmul.f32 %v954, %v956
        %v958 = vadd.f32 %v954, %v957
        %vm959 = vweird.f32 %v614
        %vm960 = vweird.f32 %v954
        %vm961 = vmor %vm959, %vm960
        %v962 = vsel %vm961, %v954, %v958
        %v963 = vand.u32 2147483647, %v614
        %vm964 = vcmp.eq.f32.partialorder %v963, 8.507059e+37
        %v965 = vand.u32 %v614, 2147483648
        %v966 = vor.u32 1.1754944e-38, %v965
        %v967 = vsel %vm964, %v966, %v962
        %v968 = vmul.f32 1.0, %v967
        %v969 = vrcp.pop %v615
        %v970 = vmul.f32 %v615, %v969
        %v971 = vsub.f32 1.0, %v970
        %v972 = vmul.f32 %v969, %v971
        %v973 = vadd.f32 %v969, %v972
        %vm974 = vweird.f32 %v615
        %vm975 = vweird.f32 %v969
        %vm976 = vmor %vm974, %vm975
        %v977 = vsel %vm976, %v969, %v973
        %v978 = vand.u32 2147483647, %v615
        %vm979 = vcmp.eq.f32.partialorder %v978, 8.507059e+37
        %v980 = vand.u32 %v615, 2147483648
        %v981 = vor.u32 1.1754944e-38, %v980
        %v982 = vsel %vm979, %v981, %v977
        %v983 = vmul.f32 1.0, %v982
        %v984 = vrcp.pop %v616
        %v985 = vmul.f32 %v616, %v984
        %v986 = vsub.f32 1.0, %v985
        %v987 = vmul.f32 %v984, %v986
        %v988 = vadd.f32 %v984, %v987
        %vm989 = vweird.f32 %v616
        %vm990 = vweird.f32 %v984
        %vm991 = vmor %vm989, %vm990
        %v992 = vsel %vm991, %v984, %v988
        %v993 = vand.u32 2147483647, %v616
        %vm994 = vcmp.eq.f32.partialorder %v993, 8.507059e+37
        %v995 = vand.u32 %v616, 2147483648
        %v996 = vor.u32 1.1754944e-38, %v995
        %v997 = vsel %vm994, %v996, %v992
        %v998 = vmul.f32 1.0, %v997
        %v999 = vrcp.pop %v617
        %v1000 = vmul.f32 %v617, %v999
        %v1001 = vsub.f32 1.0, %v1000
        %v1002 = vmul.f32 %v999, %v1001
        %v1003 = vadd.f32 %v999, %v1002
        %vm1004 = vweird.f32 %v617
        %vm1005 = vweird.f32 %v999
        %vm1006 = vmor %vm1004, %vm1005
        %v1007 = vsel %vm1006, %v999, %v1003
        %v1008 = vand.u32 2147483647, %v617
        %vm1009 = vcmp.eq.f32.partialorder %v1008, 8.507059e+37
        %v1010 = vand.u32 %v617, 2147483648
        %v1011 = vor.u32 1.1754944e-38, %v1010
        %v1012 = vsel %vm1009, %v1011, %v1007
        %v1013 = vmul.f32 1.0, %v1012
        %v1014 = vrcp.pop %v618
        %v1015 = vmul.f32 %v618, %v1014
        %v1016 = vsub.f32 1.0, %v1015
        %v1017 = vmul.f32 %v1014, %v1016
        %v1018 = vadd.f32 %v1014, %v1017
        %vm1019 = vweird.f32 %v618
        %vm1020 = vweird.f32 %v1014
        %vm1021 = vmor %vm1019, %vm1020
        %v1022 = vsel %vm1021, %v1014, %v1018
        %v1023 = vand.u32 2147483647, %v618
        %vm1024 = vcmp.eq.f32.partialorder %v1023, 8.507059e+37
        %v1025 = vand.u32 %v618, 2147483648
        %v1026 = vor.u32 1.1754944e-38, %v1025
        %v1027 = vsel %vm1024, %v1026, %v1022
        %v1028 = vmul.f32 1.0, %v1027
        %v1029 = vrcp.pop %v619
        %v1030 = vmul.f32 %v619, %v1029
        %v1031 = vsub.f32 1.0, %v1030
        %v1032 = vmul.f32 %v1029, %v1031
        %v1033 = vadd.f32 %v1029, %v1032
        %vm1034 = vweird.f32 %v619
        %vm1035 = vweird.f32 %v1029
        %vm1036 = vmor %vm1034, %vm1035
        %v1037 = vsel %vm1036, %v1029, %v1033
        %v1038 = vand.u32 2147483647, %v619
        %vm1039 = vcmp.eq.f32.partialorder %v1038, 8.507059e+37
        %v1040 = vand.u32 %v619, 2147483648
        %v1041 = vor.u32 1.1754944e-38, %v1040
        %v1042 = vsel %vm1039, %v1041, %v1037
        %v1043 = vmul.f32 1.0, %v1042
        %v1044 = vrcp.pop %v620
        %v1045 = vmul.f32 %v620, %v1044
        %v1046 = vsub.f32 1.0, %v1045
        %v1047 = vmul.f32 %v1044, %v1046
        %v1048 = vadd.f32 %v1044, %v1047
        %vm1049 = vweird.f32 %v620
        %vm1050 = vweird.f32 %v1044
        %vm1051 = vmor %vm1049, %vm1050
        %v1052 = vsel %vm1051, %v1044, %v1048
        %v1053 = vand.u32 2147483647, %v620
        %vm1054 = vcmp.eq.f32.partialorder %v1053, 8.507059e+37
        %v1055 = vand.u32 %v620, 2147483648
        %v1056 = vor.u32 1.1754944e-38, %v1055
        %v1057 = vsel %vm1054, %v1056, %v1052
        %v1058 = vmul.f32 1.0, %v1057
        %v1059 = vrcp.pop %v621
        %v1060 = vmul.f32 %v621, %v1059
        %v1061 = vsub.f32 1.0, %v1060
        %v1062 = vmul.f32 %v1059, %v1061
        %v1063 = vadd.f32 %v1059, %v1062
        %vm1064 = vweird.f32 %v621
        %vm1065 = vweird.f32 %v1059
        %vm1066 = vmor %vm1064, %vm1065
        %v1067 = vsel %vm1066, %v1059, %v1063
        %v1068 = vand.u32 2147483647, %v621
        %vm1069 = vcmp.eq.f32.partialorder %v1068, 8.507059e+37
        %v1070 = vand.u32 %v621, 2147483648
        %v1071 = vor.u32 1.1754944e-38, %v1070
        %v1072 = vsel %vm1069, %v1071, %v1067
        %v1073 = vmul.f32 1.0, %v1072
        %v1074 = vrcp.pop %v622
        %v1075 = vmul.f32 %v622, %v1074
        %v1076 = vsub.f32 1.0, %v1075
        %v1077 = vmul.f32 %v1074, %v1076
        %v1078 = vadd.f32 %v1074, %v1077
        %vm1079 = vweird.f32 %v622
        %vm1080 = vweird.f32 %v1074
        %vm1081 = vmor %vm1079, %vm1080
        %v1082 = vsel %vm1081, %v1074, %v1078
        %v1083 = vand.u32 2147483647, %v622
        %vm1084 = vcmp.eq.f32.partialorder %v1083, 8.507059e+37
        %v1085 = vand.u32 %v622, 2147483648
        %v1086 = vor.u32 1.1754944e-38, %v1085
        %v1087 = vsel %vm1084, %v1086, %v1082
        %v1088 = vmul.f32 1.0, %v1087
        %v1089 = vrcp.pop %v623
        %v1090 = vmul.f32 %v623, %v1089
        %v1091 = vsub.f32 1.0, %v1090
        %v1092 = vmul.f32 %v1089, %v1091
        %v1093 = vadd.f32 %v1089, %v1092
        %vm1094 = vweird.f32 %v623
        %vm1095 = vweird.f32 %v1089
        %vm1096 = vmor %vm1094, %vm1095
        %v1097 = vsel %vm1096, %v1089, %v1093
        %v1098 = vand.u32 2147483647, %v623
        %vm1099 = vcmp.eq.f32.partialorder %v1098, 8.507059e+37
        %v1100 = vand.u32 %v623, 2147483648
        %v1101 = vor.u32 1.1754944e-38, %v1100
        %v1102 = vsel %vm1099, %v1101, %v1097
        %v1103 = vmul.f32 1.0, %v1102
        %v1104 = vld [vmem:[%s354] sm:$0xff]
        %v1105 = vld [vmem:[%s354 + $0x8] sm:$0xff]
        %v1106 = vld [vmem:[%s354 + $0x10] sm:$0xff]
        %v1107 = vld [vmem:[%s354 + $0x18] sm:$0xff]
        %v1108 = vld [vmem:[%s354 + $0x20] sm:$0xff]
        %v1109 = vld [vmem:[%s354 + $0x28] sm:$0xff]
        %v1110 = vld [vmem:[%s354 + $0x30] sm:$0xff]
        %v1111 = vld [vmem:[%s354 + $0x38] sm:$0xff]
        %v1112 = vld [vmem:[%s354 + $0x40] sm:$0xff]
        %v1113 = vld [vmem:[%s354 + $0x48] sm:$0xff]
        %v1114 = vld [vmem:[%s354 + $0x50] sm:$0xff]
        %v1115 = vld [vmem:[%s354 + $0x58] sm:$0xff]
        %v1116 = vld [vmem:[%s354 + $0x60] sm:$0xff]
        %v1117 = vld [vmem:[%s354 + $0x68] sm:$0xff]
        %v1118 = vld [vmem:[%s354 + $0x70] sm:$0xff]
        %v1119 = vld [vmem:[%s354 + $0x78] sm:$0xff]
        %v1120 = vld [vmem:[%s354 + $0x80] sm:$0xff]
        %v1121 = vld [vmem:[%s354 + $0x88] sm:$0xff]
        %v1122 = vld [vmem:[%s354 + $0x90] sm:$0xff]
        %v1123 = vld [vmem:[%s354 + $0x98] sm:$0xff]
        %v1124 = vld [vmem:[%s354 + $0xa0] sm:$0xff]
        %v1125 = vld [vmem:[%s354 + $0xa8] sm:$0xff]
        %v1126 = vld [vmem:[%s354 + $0xb0] sm:$0xff]
        %v1127 = vld [vmem:[%s354 + $0xb8] sm:$0xff]
        %v1128 = vld [vmem:[%s354 + $0xc0] sm:$0xff]
        %v1129 = vld [vmem:[%s354 + $0xc8] sm:$0xff]
        %v1130 = vld [vmem:[%s354 + $0xd0] sm:$0xff]
        %v1131 = vld [vmem:[%s354 + $0xd8] sm:$0xff]
        %v1132 = vld [vmem:[%s354 + $0xe0] sm:$0xff]
        %v1133 = vld [vmem:[%s354 + $0xe8] sm:$0xff]
        %v1134 = vld [vmem:[%s354 + $0xf0] sm:$0xff]
        %v1135 = vld [vmem:[%s354 + $0xf8] sm:$0xff]
        %v1136 = vmul.f32 %v1104, %v638
        %v1137 = vmul.f32 %v1105, %v653
        %v1138 = vmul.f32 %v1106, %v668
        %v1139 = vmul.f32 %v1107, %v683
        %v1140 = vmul.f32 %v1108, %v698
        %v1141 = vmul.f32 %v1109, %v713
        %v1142 = vmul.f32 %v1110, %v728
        %v1143 = vmul.f32 %v1111, %v743
        %v1144 = vmul.f32 %v1112, %v758
        %v1145 = vmul.f32 %v1113, %v773
        %v1146 = vmul.f32 %v1114, %v788
        %v1147 = vmul.f32 %v1115, %v803
        %v1148 = vmul.f32 %v1116, %v818
        %v1149 = vmul.f32 %v1117, %v833
        %v1150 = vmul.f32 %v1118, %v848
        %v1151 = vmul.f32 %v1119, %v863
        %v1152 = vmul.f32 %v1120, %v878
        %v1153 = vmul.f32 %v1121, %v893
        %v1154 = vmul.f32 %v1122, %v908
        %v1155 = vmul.f32 %v1123, %v923
        %v1156 = vmul.f32 %v1124, %v938
        %v1157 = vmul.f32 %v1125, %v953
        %v1158 = vmul.f32 %v1126, %v968
        %v1159 = vmul.f32 %v1127, %v983
        %v1160 = vmul.f32 %v1128, %v998
        %v1161 = vmul.f32 %v1129, %v1013
        %v1162 = vmul.f32 %v1130, %v1028
        %v1163 = vmul.f32 %v1131, %v1043
        %v1164 = vmul.f32 %v1132, %v1058
        %v1165 = vmul.f32 %v1133, %v1073
        %v1166 = vmul.f32 %v1134, %v1088
        %v1167 = vmul.f32 %v1135, %v1103
        %v1168 = vpack.c.bf16 %v1138, %v1136
        %v1169 = vpack.c.bf16 %v1139, %v1137
        %v1170 = vpack.c.bf16 %v1142, %v1140
        %v1171 = vpack.c.bf16 %v1143, %v1141
        %v1172 = vpack.c.bf16 %v1146, %v1144
        %v1173 = vpack.c.bf16 %v1147, %v1145
        %v1174 = vpack.c.bf16 %v1150, %v1148
        %v1175 = vpack.c.bf16 %v1151, %v1149
        %v1176 = vpack.c.bf16 %v1154, %v1152
        %v1177 = vpack.c.bf16 %v1155, %v1153
        %v1178 = vpack.c.bf16 %v1158, %v1156
        %v1179 = vpack.c.bf16 %v1159, %v1157
        %v1180 = vpack.c.bf16 %v1162, %v1160
        %v1181 = vpack.c.bf16 %v1163, %v1161
        %v1182 = vpack.c.bf16 %v1166, %v1164
        %v1183 = vpack.c.bf16 %v1167, %v1165
        %v1184 = vadd.f32 %v638, %v653
        %v1185 = vadd.f32 %v1184, %v668
        %v1186 = vadd.f32 %v1185, %v683
        %v1187 = vadd.f32 %v1186, %v698
        %v1188 = vadd.f32 %v1187, %v713
        %v1189 = vadd.f32 %v1188, %v728
        %v1190 = vadd.f32 %v1189, %v743
        %v1191 = vadd.f32 %v1190, %v758
        %v1192 = vadd.f32 %v1191, %v773
        %v1193 = vadd.f32 %v1192, %v788
        %v1194 = vadd.f32 %v1193, %v803
        %v1195 = vadd.f32 %v1194, %v818
        %v1196 = vadd.f32 %v1195, %v833
        %v1197 = vadd.f32 %v1196, %v848
        %v1198 = vadd.f32 %v1197, %v863
        %v1199 = vadd.f32 %v1198, %v878
        %v1200 = vadd.f32 %v1199, %v893
        %v1201 = vadd.f32 %v1200, %v908
        %v1202 = vadd.f32 %v1201, %v923
        %v1203 = vadd.f32 %v1202, %v938
        %v1204 = vadd.f32 %v1203, %v953
        %v1205 = vadd.f32 %v1204, %v968
        %v1206 = vadd.f32 %v1205, %v983
        %v1207 = vadd.f32 %v1206, %v998
        %v1208 = vadd.f32 %v1207, %v1013
        %v1209 = vadd.f32 %v1208, %v1028
        %v1210 = vadd.f32 %v1209, %v1043
        %v1211 = vadd.f32 %v1210, %v1058
        %v1212 = vadd.f32 %v1211, %v1073
        %v1213 = vadd.f32 %v1212, %v1088
        %v1214 = vadd.f32 %v1213, %v1103
        %1215 = vadd.xlane.f32.xlu0 %v1214
        %v1216 = vpop.xlane.xlu0 %1215
        %v1217 = vrot.slane %v1216, 4
        %v1218 = vadd.f32 %v1216, %v1217
        %v1219 = vrot.slane %v1218, 2
        %v1220 = vadd.f32 %v1218, %v1219
        %v1221 = vrot.slane %v1220, 1
        %v1222 = vadd.f32 %v1220, %v1221
        %s1223 = vtos %v1222
        %v1224 = vstv %s1223
        %vm1225 = vcmask 0
        %1226 = vst.msk [vmem:[%s426] sm:$0x1] %vm1225, %v1224
        %v1227 = vld [vmem:[#allocation3] sm:$0xff]
        %v1228 = vld [vmem:[#allocation3 + $0x8] sm:$0xff]
        %v1229 = vld [vmem:[%s420] sm:$0x1]
        %v1231 = vperm.slane %v1229, 0
        %v1235 = vunpack.c.l.b16 %v1227
        %v1236 = vunpack.c.h.b16 %v1227
        %v1237 = vunpack.c.l.b16 %v1228
        %v1238 = vunpack.c.h.b16 %v1228
        %v1239 = vpack.c.b16 %v1237, %v1235
        %v1240 = vpack.c.b16 %v1238, %v1236
        %1243 = vmatpush.bf16.xpose.msra.mxu0 %v1182
        %1244 = vmatpush.bf16.xpose.msra.mxu0 %v1180
        %1245 = vmatpush.bf16.xpose.msra.mxu0 %v1178
        %1246 = vmatpush.bf16.xpose.msra.mxu0 %v1176
        %1247 = vmatpush.bf16.xpose.msra.mxu0 %v1174
        %1248 = vmatpush.bf16.xpose.msra.mxu0 %v1172
        %1249 = vmatpush.bf16.xpose.msra.mxu0 %v1170
        %1250 = vmatpush.bf16.xpose.msra.mxu0 %v1168
        %1251 = vmatmul.bf16.gmra.mxu0 %v1239
        %v1252 = vpop.f32.mrf.mxu0
        %v1253 = vadd.f32 %v1231, %v1252
        %v1254 = vpop.f32.mrf.mxu0
        %v1255 = vadd.f32 %v1231, %v1254
        %1256 = vdwg.mxu0
        %1257 = vmatpush.bf16.xpose.msra.mxu0 %v1183
        %1258 = vmatpush.bf16.xpose.msra.mxu0 %v1181
        %1259 = vmatpush.bf16.xpose.msra.mxu0 %v1179
        %1260 = vmatpush.bf16.xpose.msra.mxu0 %v1177
        %1261 = vmatpush.bf16.xpose.msra.mxu0 %v1175
        %1262 = vmatpush.bf16.xpose.msra.mxu0 %v1173
        %1263 = vmatpush.bf16.xpose.msra.mxu0 %v1171
        %1264 = vmatpush.bf16.xpose.msra.mxu0 %v1169
        %1265 = vmatmul.bf16.gmra.mxu0 %v1240
        %v1266 = vpop.f32.mrf.mxu0
        %v1267 = vadd.f32 %v1253, %v1266
        %v1268 = vpop.f32.mrf.mxu0
        %v1269 = vadd.f32 %v1255, %v1268
        %1270 = vdwg.mxu0
        %1271 = vst [vmem:[%s399] sm:$0xff] %v1267
        %1272 = vst [vmem:[%s399 + $0x8] sm:$0xff] %v1269
        %v1273 = vmul.f32 %v1267, %v1267
        %v1274 = vmul.f32 %v1269, %v1269
        %v1275 = vadd.f32 %v1273, %v1274
        %1276 = vadd.xlane.f32.xlu0 %v1275
        %v1277 = vpop.xlane.xlu0 %1276
        %v1278 = vrot.slane %v1277, 4
        %v1279 = vadd.f32 %v1277, %v1278
        %v1280 = vrot.slane %v1279, 2
        %v1281 = vadd.f32 %v1279, %v1280
        %v1282 = vrot.slane %v1281, 1
        %v1283 = vadd.f32 %v1281, %v1282
        %s1284 = vtos %v1283
        %v1285 = vstv %s1284
        %1286 = vst.msk [vmem:[%s429] sm:$0x1] %vm1225, %v1285
        %s1287 = sand.u32 %s176, 1
        %s1288 = scalar_lea.sflag [#allocation5], %s1287
        %s1289 = sand.u32 %s176, 1
        %s1290 = smul.addr %s1289, 16
        %s1291 = scalar_lea.vmem [#allocation9], %s1290
        %p1292 = scmp.lt.s32.totalorder %s31, 1
        %s1293 = scalar_select %p1292, %s31, 1
        %p1294 = scmp.lt.s32.totalorder %s32, 0
        %s1295 = scalar_select %p1294, %s32, 0
        %s1296 = sadd.s32 %s1295, %s1293
        %s1297 = scalar_lea.vmem %s6, %s1296
        %p1298 = scmp.lt.s32.totalorder %s31, 1
        %s1299 = scalar_select %p1298, %s31, 1
        %s1300 = scalar_lea.vmem %s7, %s1299
        // Predicated region
        $region53: #{tpu_custom_call.1} parent=39 // pred_check
          %p1301 = pneg %p186
        $region54: #{tpu_custom_call.1} parent=39 // pred_check_branch
          %1303 = sbr.rel (%p1301) target = $region56
        $region55: #{tpu_custom_call.1} parent=39 // pred_region
          %1305 = vsyncadd %s1288, 0
          %s1306 = smul.addr %s31, 8
          %s1307 = scalar_lea.hbm %s5, %s1306
          %s1308 = sshll.u32 %s1291, 4
          %s1309 = int_to_ptr.vmem [resolvable:$true] %s1308
          %s1310 = sshll.u32 %s1307, 4
          %s1311 = int_to_ptr.hbm [resolvable:$true] %s1310
          %1316 = dma.vmem_to_hbm [thread:$0]  %s1309, 256, %s1311, %s1288, 128, 256, 8
        $region56: #{tpu_custom_call.1} parent=39 // pred_fallthru
          _
        // Predicated region
        $region57: #{tpu_custom_call.1} parent=39 // pred_check
          %p1317 = pneg %p214
        $region58: #{tpu_custom_call.1} parent=39 // pred_check_branch
          %1319 = sbr.rel (%p1317) target = $region60
        $region59: #{tpu_custom_call.1} parent=39 // pred_region
          _
        $region60: #{tpu_custom_call.1} parent=39 // pred_fallthru
          _
        // Predicated region
        $region61: #{tpu_custom_call.1} parent=39 // pred_check
          %p1320 = pneg %p240
        $region62: #{tpu_custom_call.1} parent=39 // pred_check_branch
          %1322 = sbr.rel (%p1320) target = $region64
        $region63: #{tpu_custom_call.1} parent=39 // pred_region
          _
        $region64: #{tpu_custom_call.1} parent=39 // pred_fallthru
          _
      $region40: #{tpu_custom_call.1} parent=5 // pred_fallthru
        _
      %p1323 = scmp.le.s32.totalorder 2, %s22
      // Predicated region
      $region65: #{tpu_custom_call.1} parent=5 // pred_check
        %p1324 = pneg %p1323
      $region66: #{tpu_custom_call.1} parent=5 // pred_check_branch
        %1326 = sbr.rel (%p1324) target = $region68
      $region67: #{tpu_custom_call.1} parent=5 // pred_region
        %s1327 = ssub.s32 %s22, 2
        // Predicated region
        $region69: #{tpu_custom_call.1} parent=67 // pred_check
          %p1328 = pneg %p192
        $region70: #{tpu_custom_call.1} parent=67 // pred_check_branch
          %1330 = sbr.rel (%p1328) target = $region72
        $region71: #{tpu_custom_call.1} parent=67 // pred_region
          %s1331 = sand.u32 %s177, 1
          %s1332 = scalar_lea.sflag [#allocation5], %s1331
          %s1333 = sand.u32 %s177, 1
          %s1334 = smul.addr %s1333, 16
          %s1335 = scalar_lea.vmem [#allocation9], %s1334
          %1337 = dma.done %s1332, 256
        $region72: #{tpu_custom_call.1} parent=67 // pred_fallthru
          _
        // Predicated region
        $region73: #{tpu_custom_call.1} parent=67 // pred_check
          %p1338 = pneg %p220
        $region74: #{tpu_custom_call.1} parent=67 // pred_check_branch
          %1340 = sbr.rel (%p1338) target = $region76
        $region75: #{tpu_custom_call.1} parent=67 // pred_region
          %p1341 = scmp.lt.s32.totalorder %s33, 1
          %s1342 = scalar_select %p1341, %s33, 1
          %p1343 = scmp.lt.s32.totalorder %s34, 0
          %s1344 = scalar_select %p1343, %s34, 0
          %s1345 = sadd.s32 %s1344, %s1342
          %s1346 = scalar_lea.vmem %s6, %s1345
        $region76: #{tpu_custom_call.1} parent=67 // pred_fallthru
          _
        // Predicated region
        $region77: #{tpu_custom_call.1} parent=67 // pred_check
          %p1347 = pneg %p246
        $region78: #{tpu_custom_call.1} parent=67 // pred_check_branch
          %1349 = sbr.rel (%p1347) target = $region80
        $region79: #{tpu_custom_call.1} parent=67 // pred_region
          %p1350 = scmp.lt.s32.totalorder %s33, 1
          %s1351 = scalar_select %p1350, %s33, 1
          %s1352 = scalar_lea.vmem %s7, %s1351
        $region80: #{tpu_custom_call.1} parent=67 // pred_fallthru
          _
      $region68: #{tpu_custom_call.1} parent=5 // pred_fallthru
        _
    $region6: #{tpu_custom_call.1} parent=1 // loop_footer
      %s26 = sadd.s32 1, %s22
    $region7: #{tpu_custom_call.1} parent=1 // loop_footer_branch
      %21 = sbr.rel target = $region3
    $region8: #{tpu_custom_call.1} parent=1 // loop_exit
      _
    %1353 = vsyncpa [#allocation4], 1
    %s1354 = scalar_lea.sflag [#allocation4], 1
    %1355 = vsyncpa %s1354, 1
    %1356 = vsyncpa [#allocation7], 1
    %s1357 = scalar_lea.sflag [#allocation7], 1
    %1358 = vsyncpa %s1357, 1
    %1359 = vsyncpa [#allocation5], 1
    %s1360 = scalar_lea.sflag [#allocation5], 1
    %1361 = vsyncpa %s1360, 1

</llo_original>
